<compile_context>
chip_gen: v7x
topology: tpu7x:2x2x1
jax: 0.10.0
libtpu: 0.0.40
codegen_flags: <defaults>
</compile_context>

<pallas_src>
import functools

import jax
import jax.numpy as jnp
import numpy as np
from jax.experimental import pallas as pl
from jax.experimental.pallas import tpu as pltpu

BN_EPS = 1e-5


# --------------------------------------------------------------------------- #
# Fused kernel: conv1+bn1+relu  ->  (VMEM)  ->  conv2+bn2 + skip+bn + add + relu
# --------------------------------------------------------------------------- #
def _early_downsample_kernel(xq_ref, w1_ref, w2_ref, ws_ref, b1_ref, bo_ref,
                             mask_ref, o_ref, h1q_ref, *, Ho, Wo):
    # xq_ref : (4, Cin, Lp)   parity planes of the 1-padded input, row-major
    #                         flattened over (Ho+1, Wo+1), tail-padded to Lp.
    # w1_ref : (Cmid, 9*Cin)  conv1 weights with BN1 scale folded (tap-major K).
    # w2_ref : (Cout, 9*Cmid) conv2 weights with BN2 scale folded.
    # ws_ref : (Cout, Cin)    1x1 skip weights with BN_skip scale folded.
    # b1_ref : (Cmid, 1)      BN1 bias.    bo_ref: (Cout, 1) BN2 + BN_skip bias.
    # mask_ref:(1, L)         1.0 on valid flattened columns, 0.0 on garbage col.
    # o_ref  : (Cout, L)      output flattened over (Ho, Wo+1); wrapper drops the
    #                         garbage column.
    # h1q_ref: (4, Cmid, Lp)  scratch: parity planes of zero-padded stage-1 act.
    Wq = Wo + 1
    L = Ho * Wq

    # Zero borders of these planes are exactly conv2's padding -> re-init per block.
    h1q_ref[...] = jnp.zeros_like(h1q_ref)

    w1 = w1_ref[...]
    b1 = b1_ref[...]
    mask = mask_ref[...]

    # ---- stage 1: 3x3 stride-1 conv + BN1 + ReLU, one output parity at a time
    # so every tap operand is a contiguous slice of an input parity plane and the
    # stride-2 consumer below needs no strided / windowed reads.
    for a in range(2):
        for b in range(2):
            taps = []
            for ky in range(3):
                for kx in range(3):
                    q = ((a + ky) % 2) * 2 + (b + kx) % 2
                    off = ((a + ky) // 2) * Wq + (b + kx) // 2
                    taps.append(xq_ref[q, :, off:off + L])
            col1 = jnp.concatenate(taps, axis=0)                 # (9*Cin, L) bf16
            h = jnp.dot(w1, col1, preferred_element_type=jnp.float32) + b1
            h = jnp.maximum(h, 0.0) * mask                       # zero garbage col
            dst = a * Wq + b
            h1q_ref[(1 - a) * 2 + (1 - b), :, dst:dst + L] = h.astype(h1q_ref.dtype)

    # ---- stage 2: 3x3 stride-2 conv + BN2, 1x1 stride-2 skip + BN, add, ReLU.
    taps2 = []
    for ky in range(3):
        for kx in range(3):
            q = (ky % 2) * 2 + kx % 2
            off = (ky // 2) * Wq + kx // 2
            taps2.append(h1q_ref[q, :, off:off + L])
    col2 = jnp.concatenate(taps2, axis=0)                        # (9*Cmid, L) bf16
    acc = jnp.dot(w2_ref[...], col2, preferred_element_type=jnp.float32)
    acc = acc + jnp.dot(ws_ref[...], xq_ref[3, :, 0:L],          # skip = parity(1,1)
                        preferred_element_type=jnp.float32)
    acc = acc + bo_ref[...]
    o_ref[...] = jnp.maximum(acc, 0.0).astype(o_ref.dtype)


@jax.jit
def early_downsample_forward(x_nchw, params):
    N, Cin, H, W = x_nchw.shape
    if H % 2 or W % 2:
        raise ValueError("EarlyDownsample Pallas kernel requires even H and W")
    Cmid = params['w1'].shape[0]
    Cout = params['w2'].shape[0]
    Ho, Wo = H // 2, W // 2
    Hq, Wq = Ho + 1, Wo + 1
    Lq = Hq * Wq
    Lp = Lq + Wq                      # tail pad: every static tap slice stays in bounds
    L = Ho * Wq                       # flattened compute width (1 garbage col per row)

    # --- fold eval-mode BatchNorm into conv weights (scale) and biases --------
    def fold(stats):
        gamma, beta, mean, var = stats
        s = gamma / jnp.sqrt(var + BN_EPS)
        return s, beta - mean * s

    s1, b1 = fold(params['bn1'])
    s2, b2 = fold(params['bn2'])
    ss, bs = fold(params['bns'])

    w1_k = jnp.transpose(params['w1'] * s1[:, None, None, None],
                         (0, 2, 3, 1)).reshape(Cmid, 9 * Cin).astype(jnp.bfloat16)
    w2_k = jnp.transpose(params['w2'] * s2[:, None, None, None],
                         (0, 2, 3, 1)).reshape(Cout, 9 * Cmid).astype(jnp.bfloat16)
    ws_k = (params['ws'] * ss[:, None, None, None])[:, :, 0, 0].astype(jnp.bfloat16)
    b1_k = b1[:, None].astype(jnp.float32)
    bo_k = (b2 + bs)[:, None].astype(jnp.float32)

    # --- pad + parity-split (space-to-depth) the *input* once -----------------
    # (replaces the old per-stage pad / stack / subsample of the big h1
    #  intermediate; h1 itself never touches HBM now)
    xp = jnp.pad(x_nchw, ((0, 0), (0, 0), (1, 1), (1, 1)))
    xq = jnp.stack([xp[:, :, pu::2, pv::2] for pu in range(2) for pv in range(2)],
                   axis=1).reshape(N, 4, Cin, Lq)
    xq = jnp.pad(xq, ((0, 0), (0, 0), (0, 0), (0, Lp - Lq))).astype(jnp.bfloat16)

    mask = (jnp.arange(L) % Wq != Wo).astype(jnp.float32)[None, :]   # (1, L)

    kernel = functools.partial(_early_downsample_kernel, Ho=Ho, Wo=Wo)
    out = pl.pallas_call(
        kernel,
        out_shape=jax.ShapeDtypeStruct((N, Cout, L), jnp.float32),
        grid=(N,),
        in_specs=[
            pl.BlockSpec((None, 4, Cin, Lp), lambda n: (n, 0, 0, 0)),
            pl.BlockSpec((Cmid, 9 * Cin), lambda n: (0, 0)),
            pl.BlockSpec((Cout, 9 * Cmid), lambda n: (0, 0)),
            pl.BlockSpec((Cout, Cin), lambda n: (0, 0)),
            pl.BlockSpec((Cmid, 1), lambda n: (0, 0)),
            pl.BlockSpec((Cout, 1), lambda n: (0, 0)),
            pl.BlockSpec((1, L), lambda n: (0, 0)),
        ],
        out_specs=pl.BlockSpec((None, Cout, L), lambda n: (n, 0, 0)),
        scratch_shapes=[pltpu.VMEM((4, Cmid, Lp), jnp.bfloat16)],
        compiler_params=pltpu.CompilerParams(dimension_semantics=("parallel",)),
    )(xq, w1_k, w2_k, ws_k, b1_k, bo_k, mask)

    # drop the one garbage column per row; result is already NCHW.
    return out.reshape(N, Cout, Ho, Wq)[:, :, :, :Wo]


# --------------------------------------------------------------------------- #
# Pure-JAX reference (same math as the PyTorch module, eval-mode BN, f32)
# --------------------------------------------------------------------------- #
def reference_forward(x_nchw, params):
    def conv(x, w, stride, pad):
        return jax.lax.conv_general_dilated(
            x, w, (stride, stride), [(pad, pad), (pad, pad)],
            dimension_numbers=('NCHW', 'OIHW', 'NCHW'))

    def bn(x, stats):
        gamma, beta, mean, var = stats
        s = gamma / jnp.sqrt(var + BN_EPS)
        return x * s[None, :, None, None] + (beta - mean * s)[None, :, None, None]

    h = jnp.maximum(bn(conv(x_nchw, params['w1'], 1, 1), params['bn1']), 0.0)
    main = bn(conv(h, params['w2'], 2, 1), params['bn2'])
    skip = bn(conv(x_nchw, params['ws'], 2, 0), params['bns'])
    return jnp.maximum(main + skip, 0.0)


def init_params(key, in_channels, out_channels):
    cmid = out_channels // 2
    ks = jax.random.split(key, 6)

    def bn_stats(k, c):
        k1, k2, k3, k4 = jax.random.split(k, 4)
        gamma = jax.random.uniform(k1, (c,), jnp.float32, 0.5, 1.5)
        beta = 0.1 * jax.random.normal(k2, (c,), jnp.float32)
        mean = 0.1 * jax.random.normal(k3, (c,), jnp.float32)
        var = jax.random.uniform(k4, (c,), jnp.float32, 0.5, 1.5)
        return (gamma, beta, mean, var)

    return {
        'w1': 0.2 * jax.random.normal(ks[0], (cmid, in_channels, 3, 3), jnp.float32),
        'w2': 0.2 * jax.random.normal(ks[1], (out_channels, cmid, 3, 3), jnp.float32),
        'ws': 0.2 * jax.random.normal(ks[2], (out_channels, in_channels, 1, 1), jnp.float32),
        'bn1': bn_stats(ks[3], cmid),
        'bn2': bn_stats(ks[4], out_channels),
        'bns': bn_stats(ks[5], out_channels),
    }


if __name__ == "__main__":
    key = jax.random.PRNGKey(0)
    kx, kp = jax.random.split(key)
    N, Cin, H, W = 2, 4, 16, 16
    Cout = 8

    x = jax.random.normal(kx, (N, Cin, H, W), jnp.float32)
    params = init_params(kp, Cin, Cout)

    out = early_downsample_forward(x, params)
    out = jax.block_until_ready(out)

    ref = reference_forward(x, params)
    assert out.shape == (N, Cout, H // 2, W // 2), out.shape
    # bf16 MXU operands (f32 accumulation) -> loosened tolerance vs f32 reference
    np.testing.assert_allclose(np.asarray(out), np.asarray(ref), atol=5e-2, rtol=5e-2)
    print("KERNEL_OK")
</pallas_src>

<mosaic_0001>
module attributes {stable_mosaic.version = 11 : i64} {
  func.func @_early_downsample_kernel(%arg0: i32, %arg1: memref<1x4x4x90xbf16, #tpu.memory_space<vmem>>, %arg2: memref<4x36xbf16, #tpu.memory_space<vmem>>, %arg3: memref<8x36xbf16, #tpu.memory_space<vmem>>, %arg4: memref<8x4xbf16, #tpu.memory_space<vmem>>, %arg5: memref<4x1xf32, #tpu.memory_space<vmem>>, %arg6: memref<8x1xf32, #tpu.memory_space<vmem>>, %arg7: memref<1x72xf32, #tpu.memory_space<vmem>>, %arg8: memref<1x8x72xf32, #tpu.memory_space<vmem>>, %arg9: memref<4x4x90xbf16, #tpu.memory_space<vmem>>) attributes {dimension_semantics = [#tpu.dimension_semantics<parallel>], iteration_bounds = array<i64: 2>, scalar_prefetch = 0 : i64, scratch_operands = 1 : i64, tpu.core_type = #tpu.core_type<tc>, window_params = [{transform_indices = @transform_0, window_bounds = array<i64: 1, 4, 4, 90>}, {pipeline_mode = #tpu.pipeline_mode<synchronous>, transform_indices = @transform_1, window_bounds = array<i64: 4, 36>}, {pipeline_mode = #tpu.pipeline_mode<synchronous>, transform_indices = @transform_2, window_bounds = array<i64: 8, 36>}, {pipeline_mode = #tpu.pipeline_mode<synchronous>, transform_indices = @transform_3, window_bounds = array<i64: 8, 4>}, {pipeline_mode = #tpu.pipeline_mode<synchronous>, transform_indices = @transform_4, window_bounds = array<i64: 4, 1>}, {pipeline_mode = #tpu.pipeline_mode<synchronous>, transform_indices = @transform_5, window_bounds = array<i64: 8, 1>}, {pipeline_mode = #tpu.pipeline_mode<synchronous>, transform_indices = @transform_6, window_bounds = array<i64: 1, 72>}, {transform_indices = @transform_7, window_bounds = array<i64: 1, 8, 72>}]} {
    %cst = arith.constant 0.000000e+00 : bf16
    %0 = vector.broadcast %cst : bf16 to vector<4x4x90xbf16>
    %c0 = arith.constant 0 : index
    %c0_0 = arith.constant 0 : index
    %c0_1 = arith.constant 0 : index
    %1 = vector.load %arg9[%c0, %c0_0, %c0_1] : memref<4x4x90xbf16, #tpu.memory_space<vmem>>, vector<4x4x90xbf16>
    tpu.vector_store %arg9[%c0, %c0_0, %c0_1], %0 {strides = array<i32>} : memref<4x4x90xbf16, #tpu.memory_space<vmem>>, vector<4x4x90xbf16>,
    %c0_2 = arith.constant 0 : index
    %c0_3 = arith.constant 0 : index
    %2 = vector.load %arg2[%c0_2, %c0_3] : memref<4x36xbf16, #tpu.memory_space<vmem>>, vector<4x36xbf16>
    %c0_4 = arith.constant 0 : index
    %c0_5 = arith.constant 0 : index
    %3 = vector.load %arg5[%c0_4, %c0_5] : memref<4x1xf32, #tpu.memory_space<vmem>>, vector<4x1xf32>
    %c0_6 = arith.constant 0 : index
    %c0_7 = arith.constant 0 : index
    %4 = vector.load %arg7[%c0_6, %c0_7] : memref<1x72xf32, #tpu.memory_space<vmem>>, vector<1x72xf32>
    %c0_8 = arith.constant 0 : index
    %c0_9 = arith.constant 0 : index
    %c0_10 = arith.constant 0 : index
    %c0_11 = arith.constant 0 : index
    %5 = vector.load %arg1[%c0_8, %c0_9, %c0_10, %c0_11] : memref<1x4x4x90xbf16, #tpu.memory_space<vmem>>, vector<1x1x4x72xbf16>
    %6 = vector.shape_cast %5 : vector<1x1x4x72xbf16> to vector<4x72xbf16>
    %c0_12 = arith.constant 0 : index
    %c1 = arith.constant 1 : index
    %c0_13 = arith.constant 0 : index
    %c0_14 = arith.constant 0 : index
    %7 = vector.load %arg1[%c0_12, %c1, %c0_13, %c0_14] : memref<1x4x4x90xbf16, #tpu.memory_space<vmem>>, vector<1x1x4x72xbf16>
    %8 = vector.shape_cast %7 : vector<1x1x4x72xbf16> to vector<4x72xbf16>
    %c0_15 = arith.constant 0 : index
    %c0_16 = arith.constant 0 : index
    %c0_17 = arith.constant 0 : index
    %c1_18 = arith.constant 1 : index
    %9 = vector.load %arg1[%c0_15, %c0_16, %c0_17, %c1_18] : memref<1x4x4x90xbf16, #tpu.memory_space<vmem>>, vector<1x1x4x72xbf16>
    %10 = vector.shape_cast %9 : vector<1x1x4x72xbf16> to vector<4x72xbf16>
    %c0_19 = arith.constant 0 : index
    %c2 = arith.constant 2 : index
    %c0_20 = arith.constant 0 : index
    %c0_21 = arith.constant 0 : index
    %11 = vector.load %arg1[%c0_19, %c2, %c0_20, %c0_21] : memref<1x4x4x90xbf16, #tpu.memory_space<vmem>>, vector<1x1x4x72xbf16>
    %12 = vector.shape_cast %11 : vector<1x1x4x72xbf16> to vector<4x72xbf16>
    %c0_22 = arith.constant 0 : index
    %c3 = arith.constant 3 : index
    %c0_23 = arith.constant 0 : index
    %c0_24 = arith.constant 0 : index
    %13 = vector.load %arg1[%c0_22, %c3, %c0_23, %c0_24] : memref<1x4x4x90xbf16, #tpu.memory_space<vmem>>, vector<1x1x4x72xbf16>
    %14 = vector.shape_cast %13 : vector<1x1x4x72xbf16> to vector<4x72xbf16>
    %c0_25 = arith.constant 0 : index
    %c2_26 = arith.constant 2 : index
    %c0_27 = arith.constant 0 : index
    %c1_28 = arith.constant 1 : index
    %15 = vector.load %arg1[%c0_25, %c2_26, %c0_27, %c1_28] : memref<1x4x4x90xbf16, #tpu.memory_space<vmem>>, vector<1x1x4x72xbf16>
    %16 = vector.shape_cast %15 : vector<1x1x4x72xbf16> to vector<4x72xbf16>
    %c0_29 = arith.constant 0 : index
    %c0_30 = arith.constant 0 : index
    %c0_31 = arith.constant 0 : index
    %c9 = arith.constant 9 : index
    %17 = vector.load %arg1[%c0_29, %c0_30, %c0_31, %c9] : memref<1x4x4x90xbf16, #tpu.memory_space<vmem>>, vector<1x1x4x72xbf16>
    %18 = vector.shape_cast %17 : vector<1x1x4x72xbf16> to vector<4x72xbf16>
    %c0_32 = arith.constant 0 : index
    %c1_33 = arith.constant 1 : index
    %c0_34 = arith.constant 0 : index
    %c9_35 = arith.constant 9 : index
    %19 = vector.load %arg1[%c0_32, %c1_33, %c0_34, %c9_35] : memref<1x4x4x90xbf16, #tpu.memory_space<vmem>>, vector<1x1x4x72xbf16>
    %20 = vector.shape_cast %19 : vector<1x1x4x72xbf16> to vector<4x72xbf16>
    %c0_36 = arith.constant 0 : index
    %c0_37 = arith.constant 0 : index
    %c0_38 = arith.constant 0 : index
    %c10 = arith.constant 10 : index
    %21 = vector.load %arg1[%c0_36, %c0_37, %c0_38, %c10] : memref<1x4x4x90xbf16, #tpu.memory_space<vmem>>, vector<1x1x4x72xbf16>
    %22 = vector.shape_cast %21 : vector<1x1x4x72xbf16> to vector<4x72xbf16>
    %23 = tpu.concatenate %6, %8, %10, %12, %14, %16, %18, %20, %22 in 0 : vector<4x72xbf16>, vector<4x72xbf16>, vector<4x72xbf16>, vector<4x72xbf16>, vector<4x72xbf16>, vector<4x72xbf16>, vector<4x72xbf16>, vector<4x72xbf16>, vector<4x72xbf16> -> vector<36x72xbf16>
    %cst_39 = arith.constant dense<0.000000e+00> : vector<4x72xf32>
    %24 = tpu.matmul %2, %23, %cst_39 {dimension_numbers = #tpu.dot_dimension_numbers<[1], [0], [0], [1], [0, 0, 1, 1], [], []>} : vector<4x36xbf16>, vector<36x72xbf16>, vector<4x72xf32> -> vector<4x72xf32>
    %25 = vector.broadcast %3 : vector<4x1xf32> to vector<4x72xf32>
    %26 = arith.addf %24, %25 : vector<4x72xf32>
    %cst_40 = arith.constant 0.000000e+00 : f32
    %27 = vector.broadcast %cst_40 : f32 to vector<4x72xf32>
    %28 = arith.maximumf %26, %27 : vector<4x72xf32>
    %29 = vector.broadcast %4 : vector<1x72xf32> to vector<4x72xf32>
    %30 = arith.mulf %28, %29 : vector<4x72xf32>
    %31 = arith.truncf %30 : vector<4x72xf32> to vector<4x72xbf16>
    %c3_41 = arith.constant 3 : index
    %c0_42 = arith.constant 0 : index
    %c0_43 = arith.constant 0 : index
    %32 = vector.load %arg9[%c3_41, %c0_42, %c0_43] : memref<4x4x90xbf16, #tpu.memory_space<vmem>>, vector<1x4x72xbf16>
    %33 = vector.shape_cast %32 : vector<1x4x72xbf16> to vector<4x72xbf16>
    %34 = vector.shape_cast %31 : vector<4x72xbf16> to vector<1x4x72xbf16>
    tpu.vector_store %arg9[%c3_41, %c0_42, %c0_43], %34 {strides = array<i32>} : memref<4x4x90xbf16, #tpu.memory_space<vmem>>, vector<1x4x72xbf16>,
    %c0_44 = arith.constant 0 : index
    %c1_45 = arith.constant 1 : index
    %c0_46 = arith.constant 0 : index
    %c0_47 = arith.constant 0 : index
    %35 = vector.load %arg1[%c0_44, %c1_45, %c0_46, %c0_47] : memref<1x4x4x90xbf16, #tpu.memory_space<vmem>>, vector<1x1x4x72xbf16>
    %36 = vector.shape_cast %35 : vector<1x1x4x72xbf16> to vector<4x72xbf16>
    %c0_48 = arith.constant 0 : index
    %c0_49 = arith.constant 0 : index
    %c0_50 = arith.constant 0 : index
    %c1_51 = arith.constant 1 : index
    %37 = vector.load %arg1[%c0_48, %c0_49, %c0_50, %c1_51] : memref<1x4x4x90xbf16, #tpu.memory_space<vmem>>, vector<1x1x4x72xbf16>
    %38 = vector.shape_cast %37 : vector<1x1x4x72xbf16> to vector<4x72xbf16>
    %c0_52 = arith.constant 0 : index
    %c1_53 = arith.constant 1 : index
    %c0_54 = arith.constant 0 : index
    %c1_55 = arith.constant 1 : index
    %39 = vector.load %arg1[%c0_52, %c1_53, %c0_54, %c1_55] : memref<1x4x4x90xbf16, #tpu.memory_space<vmem>>, vector<1x1x4x72xbf16>
    %40 = vector.shape_cast %39 : vector<1x1x4x72xbf16> to vector<4x72xbf16>
    %c0_56 = arith.constant 0 : index
    %c3_57 = arith.constant 3 : index
    %c0_58 = arith.constant 0 : index
    %c0_59 = arith.constant 0 : index
    %41 = vector.load %arg1[%c0_56, %c3_57, %c0_58, %c0_59] : memref<1x4x4x90xbf16, #tpu.memory_space<vmem>>, vector<1x1x4x72xbf16>
    %42 = vector.shape_cast %41 : vector<1x1x4x72xbf16> to vector<4x72xbf16>
    %c0_60 = arith.constant 0 : index
    %c2_61 = arith.constant 2 : index
    %c0_62 = arith.constant 0 : index
    %c1_63 = arith.constant 1 : index
    %43 = vector.load %arg1[%c0_60, %c2_61, %c0_62, %c1_63] : memref<1x4x4x90xbf16, #tpu.memory_space<vmem>>, vector<1x1x4x72xbf16>
    %44 = vector.shape_cast %43 : vector<1x1x4x72xbf16> to vector<4x72xbf16>
    %c0_64 = arith.constant 0 : index
    %c3_65 = arith.constant 3 : index
    %c0_66 = arith.constant 0 : index
    %c1_67 = arith.constant 1 : index
    %45 = vector.load %arg1[%c0_64, %c3_65, %c0_66, %c1_67] : memref<1x4x4x90xbf16, #tpu.memory_space<vmem>>, vector<1x1x4x72xbf16>
    %46 = vector.shape_cast %45 : vector<1x1x4x72xbf16> to vector<4x72xbf16>
    %c0_68 = arith.constant 0 : index
    %c1_69 = arith.constant 1 : index
    %c0_70 = arith.constant 0 : index
    %c9_71 = arith.constant 9 : index
    %47 = vector.load %arg1[%c0_68, %c1_69, %c0_70, %c9_71] : memref<1x4x4x90xbf16, #tpu.memory_space<vmem>>, vector<1x1x4x72xbf16>
    %48 = vector.shape_cast %47 : vector<1x1x4x72xbf16> to vector<4x72xbf16>
    %c0_72 = arith.constant 0 : index
    %c0_73 = arith.constant 0 : index
    %c0_74 = arith.constant 0 : index
    %c10_75 = arith.constant 10 : index
    %49 = vector.load %arg1[%c0_72, %c0_73, %c0_74, %c10_75] : memref<1x4x4x90xbf16, #tpu.memory_space<vmem>>, vector<1x1x4x72xbf16>
    %50 = vector.shape_cast %49 : vector<1x1x4x72xbf16> to vector<4x72xbf16>
    %c0_76 = arith.constant 0 : index
    %c1_77 = arith.constant 1 : index
    %c0_78 = arith.constant 0 : index
    %c10_79 = arith.constant 10 : index
    %51 = vector.load %arg1[%c0_76, %c1_77, %c0_78, %c10_79] : memref<1x4x4x90xbf16, #tpu.memory_space<vmem>>, vector<1x1x4x72xbf16>
    %52 = vector.shape_cast %51 : vector<1x1x4x72xbf16> to vector<4x72xbf16>
    %53 = tpu.concatenate %36, %38, %40, %42, %44, %46, %48, %50, %52 in 0 : vector<4x72xbf16>, vector<4x72xbf16>, vector<4x72xbf16>, vector<4x72xbf16>, vector<4x72xbf16>, vector<4x72xbf16>, vector<4x72xbf16>, vector<4x72xbf16>, vector<4x72xbf16> -> vector<36x72xbf16>
    %cst_80 = arith.constant dense<0.000000e+00> : vector<4x72xf32>
    %54 = tpu.matmul %2, %53, %cst_80 {dimension_numbers = #tpu.dot_dimension_numbers<[1], [0], [0], [1], [0, 0, 1, 1], [], []>} : vector<4x36xbf16>, vector<36x72xbf16>, vector<4x72xf32> -> vector<4x72xf32>
    %55 = vector.broadcast %3 : vector<4x1xf32> to vector<4x72xf32>
    %56 = arith.addf %54, %55 : vector<4x72xf32>
    %cst_81 = arith.constant 0.000000e+00 : f32
    %57 = vector.broadcast %cst_81 : f32 to vector<4x72xf32>
    %58 = arith.maximumf %56, %57 : vector<4x72xf32>
    %59 = vector.broadcast %4 : vector<1x72xf32> to vector<4x72xf32>
    %60 = arith.mulf %58, %59 : vector<4x72xf32>
    %61 = arith.truncf %60 : vector<4x72xf32> to vector<4x72xbf16>
    %c2_82 = arith.constant 2 : index
    %c0_83 = arith.constant 0 : index
    %c1_84 = arith.constant 1 : index
    %62 = vector.load %arg9[%c2_82, %c0_83, %c1_84] : memref<4x4x90xbf16, #tpu.memory_space<vmem>>, vector<1x4x72xbf16>
    %63 = vector.shape_cast %62 : vector<1x4x72xbf16> to vector<4x72xbf16>
    %64 = vector.shape_cast %61 : vector<4x72xbf16> to vector<1x4x72xbf16>
    tpu.vector_store %arg9[%c2_82, %c0_83, %c1_84], %64 {strides = array<i32>} : memref<4x4x90xbf16, #tpu.memory_space<vmem>>, vector<1x4x72xbf16>,
    %c0_85 = arith.constant 0 : index
    %c2_86 = arith.constant 2 : index
    %c0_87 = arith.constant 0 : index
    %c0_88 = arith.constant 0 : index
    %65 = vector.load %arg1[%c0_85, %c2_86, %c0_87, %c0_88] : memref<1x4x4x90xbf16, #tpu.memory_space<vmem>>, vector<1x1x4x72xbf16>
    %66 = vector.shape_cast %65 : vector<1x1x4x72xbf16> to vector<4x72xbf16>
    %c0_89 = arith.constant 0 : index
    %c3_90 = arith.constant 3 : index
    %c0_91 = arith.constant 0 : index
    %c0_92 = arith.constant 0 : index
    %67 = vector.load %arg1[%c0_89, %c3_90, %c0_91, %c0_92] : memref<1x4x4x90xbf16, #tpu.memory_space<vmem>>, vector<1x1x4x72xbf16>
    %68 = vector.shape_cast %67 : vector<1x1x4x72xbf16> to vector<4x72xbf16>
    %c0_93 = arith.constant 0 : index
    %c2_94 = arith.constant 2 : index
    %c0_95 = arith.constant 0 : index
    %c1_96 = arith.constant 1 : index
    %69 = vector.load %arg1[%c0_93, %c2_94, %c0_95, %c1_96] : memref<1x4x4x90xbf16, #tpu.memory_space<vmem>>, vector<1x1x4x72xbf16>
    %70 = vector.shape_cast %69 : vector<1x1x4x72xbf16> to vector<4x72xbf16>
    %c0_97 = arith.constant 0 : index
    %c0_98 = arith.constant 0 : index
    %c0_99 = arith.constant 0 : index
    %c9_100 = arith.constant 9 : index
    %71 = vector.load %arg1[%c0_97, %c0_98, %c0_99, %c9_100] : memref<1x4x4x90xbf16, #tpu.memory_space<vmem>>, vector<1x1x4x72xbf16>
    %72 = vector.shape_cast %71 : vector<1x1x4x72xbf16> to vector<4x72xbf16>
    %c0_101 = arith.constant 0 : index
    %c1_102 = arith.constant 1 : index
    %c0_103 = arith.constant 0 : index
    %c9_104 = arith.constant 9 : index
    %73 = vector.load %arg1[%c0_101, %c1_102, %c0_103, %c9_104] : memref<1x4x4x90xbf16, #tpu.memory_space<vmem>>, vector<1x1x4x72xbf16>
    %74 = vector.shape_cast %73 : vector<1x1x4x72xbf16> to vector<4x72xbf16>
    %c0_105 = arith.constant 0 : index
    %c0_106 = arith.constant 0 : index
    %c0_107 = arith.constant 0 : index
    %c10_108 = arith.constant 10 : index
    %75 = vector.load %arg1[%c0_105, %c0_106, %c0_107, %c10_108] : memref<1x4x4x90xbf16, #tpu.memory_space<vmem>>, vector<1x1x4x72xbf16>
    %76 = vector.shape_cast %75 : vector<1x1x4x72xbf16> to vector<4x72xbf16>
    %c0_109 = arith.constant 0 : index
    %c2_110 = arith.constant 2 : index
    %c0_111 = arith.constant 0 : index
    %c9_112 = arith.constant 9 : index
    %77 = vector.load %arg1[%c0_109, %c2_110, %c0_111, %c9_112] : memref<1x4x4x90xbf16, #tpu.memory_space<vmem>>, vector<1x1x4x72xbf16>
    %78 = vector.shape_cast %77 : vector<1x1x4x72xbf16> to vector<4x72xbf16>
    %c0_113 = arith.constant 0 : index
    %c3_114 = arith.constant 3 : index
    %c0_115 = arith.constant 0 : index
    %c9_116 = arith.constant 9 : index
    %79 = vector.load %arg1[%c0_113, %c3_114, %c0_115, %c9_116] : memref<1x4x4x90xbf16, #tpu.memory_space<vmem>>, vector<1x1x4x72xbf16>
    %80 = vector.shape_cast %79 : vector<1x1x4x72xbf16> to vector<4x72xbf16>
    %c0_117 = arith.constant 0 : index
    %c2_118 = arith.constant 2 : index
    %c0_119 = arith.constant 0 : index
    %c10_120 = arith.constant 10 : index
    %81 = vector.load %arg1[%c0_117, %c2_118, %c0_119, %c10_120] : memref<1x4x4x90xbf16, #tpu.memory_space<vmem>>, vector<1x1x4x72xbf16>
    %82 = vector.shape_cast %81 : vector<1x1x4x72xbf16> to vector<4x72xbf16>
    %83 = tpu.concatenate %66, %68, %70, %72, %74, %76, %78, %80, %82 in 0 : vector<4x72xbf16>, vector<4x72xbf16>, vector<4x72xbf16>, vector<4x72xbf16>, vector<4x72xbf16>, vector<4x72xbf16>, vector<4x72xbf16>, vector<4x72xbf16>, vector<4x72xbf16> -> vector<36x72xbf16>
    %cst_121 = arith.constant dense<0.000000e+00> : vector<4x72xf32>
    %84 = tpu.matmul %2, %83, %cst_121 {dimension_numbers = #tpu.dot_dimension_numbers<[1], [0], [0], [1], [0, 0, 1, 1], [], []>} : vector<4x36xbf16>, vector<36x72xbf16>, vector<4x72xf32> -> vector<4x72xf32>
    %85 = vector.broadcast %3 : vector<4x1xf32> to vector<4x72xf32>
    %86 = arith.addf %84, %85 : vector<4x72xf32>
    %cst_122 = arith.constant 0.000000e+00 : f32
    %87 = vector.broadcast %cst_122 : f32 to vector<4x72xf32>
    %88 = arith.maximumf %86, %87 : vector<4x72xf32>
    %89 = vector.broadcast %4 : vector<1x72xf32> to vector<4x72xf32>
    %90 = arith.mulf %88, %89 : vector<4x72xf32>
    %91 = arith.truncf %90 : vector<4x72xf32> to vector<4x72xbf16>
    %c1_123 = arith.constant 1 : index
    %c0_124 = arith.constant 0 : index
    %c9_125 = arith.constant 9 : index
    %92 = vector.load %arg9[%c1_123, %c0_124, %c9_125] : memref<4x4x90xbf16, #tpu.memory_space<vmem>>, vector<1x4x72xbf16>
    %93 = vector.shape_cast %92 : vector<1x4x72xbf16> to vector<4x72xbf16>
    %94 = vector.shape_cast %91 : vector<4x72xbf16> to vector<1x4x72xbf16>
    tpu.vector_store %arg9[%c1_123, %c0_124, %c9_125], %94 {strides = array<i32>} : memref<4x4x90xbf16, #tpu.memory_space<vmem>>, vector<1x4x72xbf16>,
    %c0_126 = arith.constant 0 : index
    %c3_127 = arith.constant 3 : index
    %c0_128 = arith.constant 0 : index
    %c0_129 = arith.constant 0 : index
    %95 = vector.load %arg1[%c0_126, %c3_127, %c0_128, %c0_129] : memref<1x4x4x90xbf16, #tpu.memory_space<vmem>>, vector<1x1x4x72xbf16>
    %96 = vector.shape_cast %95 : vector<1x1x4x72xbf16> to vector<4x72xbf16>
    %c0_130 = arith.constant 0 : index
    %c2_131 = arith.constant 2 : index
    %c0_132 = arith.constant 0 : index
    %c1_133 = arith.constant 1 : index
    %97 = vector.load %arg1[%c0_130, %c2_131, %c0_132, %c1_133] : memref<1x4x4x90xbf16, #tpu.memory_space<vmem>>, vector<1x1x4x72xbf16>
    %98 = vector.shape_cast %97 : vector<1x1x4x72xbf16> to vector<4x72xbf16>
    %c0_134 = arith.constant 0 : index
    %c3_135 = arith.constant 3 : index
    %c0_136 = arith.constant 0 : index
    %c1_137 = arith.constant 1 : index
    %99 = vector.load %arg1[%c0_134, %c3_135, %c0_136, %c1_137] : memref<1x4x4x90xbf16, #tpu.memory_space<vmem>>, vector<1x1x4x72xbf16>
    %100 = vector.shape_cast %99 : vector<1x1x4x72xbf16> to vector<4x72xbf16>
    %c0_138 = arith.constant 0 : index
    %c1_139 = arith.constant 1 : index
    %c0_140 = arith.constant 0 : index
    %c9_141 = arith.constant 9 : index
    %101 = vector.load %arg1[%c0_138, %c1_139, %c0_140, %c9_141] : memref<1x4x4x90xbf16, #tpu.memory_space<vmem>>, vector<1x1x4x72xbf16>
    %102 = vector.shape_cast %101 : vector<1x1x4x72xbf16> to vector<4x72xbf16>
    %c0_142 = arith.constant 0 : index
    %c0_143 = arith.constant 0 : index
    %c0_144 = arith.constant 0 : index
    %c10_145 = arith.constant 10 : index
    %103 = vector.load %arg1[%c0_142, %c0_143, %c0_144, %c10_145] : memref<1x4x4x90xbf16, #tpu.memory_space<vmem>>, vector<1x1x4x72xbf16>
    %104 = vector.shape_cast %103 : vector<1x1x4x72xbf16> to vector<4x72xbf16>
    %c0_146 = arith.constant 0 : index
    %c1_147 = arith.constant 1 : index
    %c0_148 = arith.constant 0 : index
    %c10_149 = arith.constant 10 : index
    %105 = vector.load %arg1[%c0_146, %c1_147, %c0_148, %c10_149] : memref<1x4x4x90xbf16, #tpu.memory_space<vmem>>, vector<1x1x4x72xbf16>
    %106 = vector.shape_cast %105 : vector<1x1x4x72xbf16> to vector<4x72xbf16>
    %c0_150 = arith.constant 0 : index
    %c3_151 = arith.constant 3 : index
    %c0_152 = arith.constant 0 : index
    %c9_153 = arith.constant 9 : index
    %107 = vector.load %arg1[%c0_150, %c3_151, %c0_152, %c9_153] : memref<1x4x4x90xbf16, #tpu.memory_space<vmem>>, vector<1x1x4x72xbf16>
    %108 = vector.shape_cast %107 : vector<1x1x4x72xbf16> to vector<4x72xbf16>
    %c0_154 = arith.constant 0 : index
    %c2_155 = arith.constant 2 : index
    %c0_156 = arith.constant 0 : index
    %c10_157 = arith.constant 10 : index
    %109 = vector.load %arg1[%c0_154, %c2_155, %c0_156, %c10_157] : memref<1x4x4x90xbf16, #tpu.memory_space<vmem>>, vector<1x1x4x72xbf16>
    %110 = vector.shape_cast %109 : vector<1x1x4x72xbf16> to vector<4x72xbf16>
    %c0_158 = arith.constant 0 : index
    %c3_159 = arith.constant 3 : index
    %c0_160 = arith.constant 0 : index
    %c10_161 = arith.constant 10 : index
    %111 = vector.load %arg1[%c0_158, %c3_159, %c0_160, %c10_161] : memref<1x4x4x90xbf16, #tpu.memory_space<vmem>>, vector<1x1x4x72xbf16>
    %112 = vector.shape_cast %111 : vector<1x1x4x72xbf16> to vector<4x72xbf16>
    %113 = tpu.concatenate %96, %98, %100, %102, %104, %106, %108, %110, %112 in 0 : vector<4x72xbf16>, vector<4x72xbf16>, vector<4x72xbf16>, vector<4x72xbf16>, vector<4x72xbf16>, vector<4x72xbf16>, vector<4x72xbf16>, vector<4x72xbf16>, vector<4x72xbf16> -> vector<36x72xbf16>
    %cst_162 = arith.constant dense<0.000000e+00> : vector<4x72xf32>
    %114 = tpu.matmul %2, %113, %cst_162 {dimension_numbers = #tpu.dot_dimension_numbers<[1], [0], [0], [1], [0, 0, 1, 1], [], []>} : vector<4x36xbf16>, vector<36x72xbf16>, vector<4x72xf32> -> vector<4x72xf32>
    %115 = vector.broadcast %3 : vector<4x1xf32> to vector<4x72xf32>
    %116 = arith.addf %114, %115 : vector<4x72xf32>
    %cst_163 = arith.constant 0.000000e+00 : f32
    %117 = vector.broadcast %cst_163 : f32 to vector<4x72xf32>
    %118 = arith.maximumf %116, %117 : vector<4x72xf32>
    %119 = vector.broadcast %4 : vector<1x72xf32> to vector<4x72xf32>
    %120 = arith.mulf %118, %119 : vector<4x72xf32>
    %121 = arith.truncf %120 : vector<4x72xf32> to vector<4x72xbf16>
    %c0_164 = arith.constant 0 : index
    %c0_165 = arith.constant 0 : index
    %c10_166 = arith.constant 10 : index
    %122 = vector.load %arg9[%c0_164, %c0_165, %c10_166] : memref<4x4x90xbf16, #tpu.memory_space<vmem>>, vector<1x4x72xbf16>
    %123 = vector.shape_cast %122 : vector<1x4x72xbf16> to vector<4x72xbf16>
    %124 = vector.shape_cast %121 : vector<4x72xbf16> to vector<1x4x72xbf16>
    tpu.vector_store %arg9[%c0_164, %c0_165, %c10_166], %124 {strides = array<i32>} : memref<4x4x90xbf16, #tpu.memory_space<vmem>>, vector<1x4x72xbf16>,
    %c0_167 = arith.constant 0 : index
    %c0_168 = arith.constant 0 : index
    %c0_169 = arith.constant 0 : index
    %125 = vector.load %arg9[%c0_167, %c0_168, %c0_169] : memref<4x4x90xbf16, #tpu.memory_space<vmem>>, vector<1x4x72xbf16>
    %126 = vector.shape_cast %125 : vector<1x4x72xbf16> to vector<4x72xbf16>
    %c1_170 = arith.constant 1 : index
    %c0_171 = arith.constant 0 : index
    %c0_172 = arith.constant 0 : index
    %127 = vector.load %arg9[%c1_170, %c0_171, %c0_172] : memref<4x4x90xbf16, #tpu.memory_space<vmem>>, vector<1x4x72xbf16>
    %128 = vector.shape_cast %127 : vector<1x4x72xbf16> to vector<4x72xbf16>
    %c0_173 = arith.constant 0 : index
    %c0_174 = arith.constant 0 : index
    %c1_175 = arith.constant 1 : index
    %129 = vector.load %arg9[%c0_173, %c0_174, %c1_175] : memref<4x4x90xbf16, #tpu.memory_space<vmem>>, vector<1x4x72xbf16>
    %130 = vector.shape_cast %129 : vector<1x4x72xbf16> to vector<4x72xbf16>
    %c2_176 = arith.constant 2 : index
    %c0_177 = arith.constant 0 : index
    %c0_178 = arith.constant 0 : index
    %131 = vector.load %arg9[%c2_176, %c0_177, %c0_178] : memref<4x4x90xbf16, #tpu.memory_space<vmem>>, vector<1x4x72xbf16>
    %132 = vector.shape_cast %131 : vector<1x4x72xbf16> to vector<4x72xbf16>
    %c3_179 = arith.constant 3 : index
    %c0_180 = arith.constant 0 : index
    %c0_181 = arith.constant 0 : index
    %133 = vector.load %arg9[%c3_179, %c0_180, %c0_181] : memref<4x4x90xbf16, #tpu.memory_space<vmem>>, vector<1x4x72xbf16>
    %134 = vector.shape_cast %133 : vector<1x4x72xbf16> to vector<4x72xbf16>
    %c2_182 = arith.constant 2 : index
    %c0_183 = arith.constant 0 : index
    %c1_184 = arith.constant 1 : index
    %135 = vector.load %arg9[%c2_182, %c0_183, %c1_184] : memref<4x4x90xbf16, #tpu.memory_space<vmem>>, vector<1x4x72xbf16>
    %136 = vector.shape_cast %135 : vector<1x4x72xbf16> to vector<4x72xbf16>
    %c0_185 = arith.constant 0 : index
    %c0_186 = arith.constant 0 : index
    %c9_187 = arith.constant 9 : index
    %137 = vector.load %arg9[%c0_185, %c0_186, %c9_187] : memref<4x4x90xbf16, #tpu.memory_space<vmem>>, vector<1x4x72xbf16>
    %138 = vector.shape_cast %137 : vector<1x4x72xbf16> to vector<4x72xbf16>
    %c1_188 = arith.constant 1 : index
    %c0_189 = arith.constant 0 : index
    %c9_190 = arith.constant 9 : index
    %139 = vector.load %arg9[%c1_188, %c0_189, %c9_190] : memref<4x4x90xbf16, #tpu.memory_space<vmem>>, vector<1x4x72xbf16>
    %140 = vector.shape_cast %139 : vector<1x4x72xbf16> to vector<4x72xbf16>
    %c0_191 = arith.constant 0 : index
    %c0_192 = arith.constant 0 : index
    %c10_193 = arith.constant 10 : index
    %141 = vector.load %arg9[%c0_191, %c0_192, %c10_193] : memref<4x4x90xbf16, #tpu.memory_space<vmem>>, vector<1x4x72xbf16>
    %142 = vector.shape_cast %141 : vector<1x4x72xbf16> to vector<4x72xbf16>
    %143 = tpu.concatenate %126, %128, %130, %132, %134, %136, %138, %140, %142 in 0 : vector<4x72xbf16>, vector<4x72xbf16>, vector<4x72xbf16>, vector<4x72xbf16>, vector<4x72xbf16>, vector<4x72xbf16>, vector<4x72xbf16>, vector<4x72xbf16>, vector<4x72xbf16> -> vector<36x72xbf16>
    %c0_194 = arith.constant 0 : index
    %c0_195 = arith.constant 0 : index
    %144 = vector.load %arg3[%c0_194, %c0_195] : memref<8x36xbf16, #tpu.memory_space<vmem>>, vector<8x36xbf16>
    %cst_196 = arith.constant dense<0.000000e+00> : vector<8x72xf32>
    %145 = tpu.matmul %144, %143, %cst_196 {dimension_numbers = #tpu.dot_dimension_numbers<[1], [0], [0], [1], [0, 0, 1, 1], [], []>} : vector<8x36xbf16>, vector<36x72xbf16>, vector<8x72xf32> -> vector<8x72xf32>
    %c0_197 = arith.constant 0 : index
    %c0_198 = arith.constant 0 : index
    %146 = vector.load %arg4[%c0_197, %c0_198] : memref<8x4xbf16, #tpu.memory_space<vmem>>, vector<8x4xbf16>
    %c0_199 = arith.constant 0 : index
    %c3_200 = arith.constant 3 : index
    %c0_201 = arith.constant 0 : index
    %c0_202 = arith.constant 0 : index
    %147 = vector.load %arg1[%c0_199, %c3_200, %c0_201, %c0_202] : memref<1x4x4x90xbf16, #tpu.memory_space<vmem>>, vector<1x1x4x72xbf16>
    %148 = vector.shape_cast %147 : vector<1x1x4x72xbf16> to vector<4x72xbf16>
    %cst_203 = arith.constant dense<0.000000e+00> : vector<8x72xf32>
    %149 = tpu.matmul %146, %148, %cst_203 {dimension_numbers = #tpu.dot_dimension_numbers<[1], [0], [0], [1], [0, 0, 1, 1], [], []>} : vector<8x4xbf16>, vector<4x72xbf16>, vector<8x72xf32> -> vector<8x72xf32>
    %150 = arith.addf %145, %149 : vector<8x72xf32>
    %c0_204 = arith.constant 0 : index
    %c0_205 = arith.constant 0 : index
    %151 = vector.load %arg6[%c0_204, %c0_205] : memref<8x1xf32, #tpu.memory_space<vmem>>, vector<8x1xf32>
    %152 = vector.broadcast %151 : vector<8x1xf32> to vector<8x72xf32>
    %153 = arith.addf %150, %152 : vector<8x72xf32>
    %cst_206 = arith.constant 0.000000e+00 : f32
    %154 = vector.broadcast %cst_206 : f32 to vector<8x72xf32>
    %155 = arith.maximumf %153, %154 : vector<8x72xf32>
    %c0_207 = arith.constant 0 : index
    %c0_208 = arith.constant 0 : index
    %c0_209 = arith.constant 0 : index
    %156 = vector.load %arg8[%c0_207, %c0_208, %c0_209] : memref<1x8x72xf32, #tpu.memory_space<vmem>>, vector<1x8x72xf32>
    %157 = vector.shape_cast %156 : vector<1x8x72xf32> to vector<8x72xf32>
    %158 = vector.shape_cast %155 : vector<8x72xf32> to vector<1x8x72xf32>
    tpu.vector_store %arg8[%c0_207, %c0_208, %c0_209], %158 {strides = array<i32>} : memref<1x8x72xf32, #tpu.memory_space<vmem>>, vector<1x8x72xf32>,
    return
  }
  func.func @transform_0(%arg0: i32) -> (i32, i32, i32, i32) {
    %c0_i32 = arith.constant 0 : i32
    %c0_i32_0 = arith.constant 0 : i32
    %c0_i32_1 = arith.constant 0 : i32
    %c0_i32_2 = arith.constant 0 : i32
    return %arg0, %c0_i32, %c0_i32_0, %c0_i32_1 : i32, i32, i32, i32
  }
  func.func @transform_1(%arg0: i32) -> (i32, i32) {
    %c0_i32 = arith.constant 0 : i32
    %c0_i32_0 = arith.constant 0 : i32
    %c0_i32_1 = arith.constant 0 : i32
    return %c0_i32, %c0_i32_0 : i32, i32
  }
  func.func @transform_2(%arg0: i32) -> (i32, i32) {
    %c0_i32 = arith.constant 0 : i32
    %c0_i32_0 = arith.constant 0 : i32
    %c0_i32_1 = arith.constant 0 : i32
    return %c0_i32, %c0_i32_0 : i32, i32
  }
  func.func @transform_3(%arg0: i32) -> (i32, i32) {
    %c0_i32 = arith.constant 0 : i32
    %c0_i32_0 = arith.constant 0 : i32
    %c0_i32_1 = arith.constant 0 : i32
    return %c0_i32, %c0_i32_0 : i32, i32
  }
  func.func @transform_4(%arg0: i32) -> (i32, i32) {
    %c0_i32 = arith.constant 0 : i32
    %c0_i32_0 = arith.constant 0 : i32
    %c0_i32_1 = arith.constant 0 : i32
    return %c0_i32, %c0_i32_0 : i32, i32
  }
  func.func @transform_5(%arg0: i32) -> (i32, i32) {
    %c0_i32 = arith.constant 0 : i32
    %c0_i32_0 = arith.constant 0 : i32
    %c0_i32_1 = arith.constant 0 : i32
    return %c0_i32, %c0_i32_0 : i32, i32
  }
  func.func @transform_6(%arg0: i32) -> (i32, i32) {
    %c0_i32 = arith.constant 0 : i32
    %c0_i32_0 = arith.constant 0 : i32
    %c0_i32_1 = arith.constant 0 : i32
    return %c0_i32, %c0_i32_0 : i32, i32
  }
  func.func @transform_7(%arg0: i32) -> (i32, i32, i32) {
    %c0_i32 = arith.constant 0 : i32
    %c0_i32_0 = arith.constant 0 : i32
    %c0_i32_1 = arith.constant 0 : i32
    return %arg0, %c0_i32, %c0_i32_0 : i32, i32, i32
  }
}

</mosaic_0001>

<llo_original>
// kernel: early_downsample_forward.1
$region0: #{early_downsample_forward.1}
  #allocation0 [shape = 'u32[]', space=smem, size = 0x4, offset = 0x4, fixed_abs, tag = 'smem constant byte address 0x4 - core index']
  #allocation1 [shape = 'u32[144,128]{1,0:T(1,128)}', space=vmem, size = 0x12000, scoped, tag = 'internal scratch']
  #allocation2 [shape = 'bf16[4,4,90]{2,1,0:T(4,128)(2,1)}', space=vmem, size = 0x1000, scoped, tag = 'scratch operand']
  %s0 = inlined_call_operand.vmem [shape: bf16[2,4,4,90], index: 0, kind: input, shape index: {}]
  %s1 = inlined_call_operand.vmem [shape: bf16[4,36], index: 1, kind: input, shape index: {}]
  %s2 = inlined_call_operand.vmem [shape: bf16[8,36], index: 2, kind: input, shape index: {}]
  %s3 = inlined_call_operand.vmem [shape: bf16[8,4], index: 3, kind: input, shape index: {}]
  %s4 = inlined_call_operand.vmem [shape: f32[4,1], index: 4, kind: input, shape index: {}]
  %s5 = inlined_call_operand.vmem [shape: f32[8,1], index: 5, kind: input, shape index: {}]
  %s6 = inlined_call_operand.vmem [shape: f32[1,72], index: 6, kind: input, shape index: {}]
  %s7 = inlined_call_operand.vmem [shape: f32[2,8,72], index: 7, kind: output, shape index: {}]
  %s8 = sld [smem:[#allocation0]]
  $region61: #{early_downsample_forward.1} parent=0
    _
  %s10 = ssub.s32 1, %s8
  %s11 = scalar_select 0, %s10, %s8
  loop: start=0, step=1, limit=4
  $region2: #{early_downsample_forward.1} parent=0 // loop_pre_header
    _
  $region3: #{early_downsample_forward.1} parent=0 // loop_header
    %s13 = sphi 0, %s17
    %p14 = scmp.ge.s32.totalorder %s13, 4
    %s23 = sphi 0, %s25
    %s26 = sphi 0, %s23
    %s27 = sphi 0, %s26
    %s43 = sphi 0, %s27
    %s47 = sphi 0, %s47
    %s49 = sphi 0, %s47
    %s50 = sphi 0, %s49
    %s64 = sphi 0, %s50
    %s68 = sphi 0, %s68
    %s70 = sphi 0, %s68
    %s71 = sphi 0, %s70
    %s85 = sphi 0, %s71
    %s89 = sphi 0, %s89
    %s91 = sphi 0, %s89
    %s92 = sphi 0, %s91
    %s106 = sphi 0, %s92
    %s110 = sphi 0, %s110
    %s112 = sphi 0, %s110
    %s113 = sphi 0, %s112
    %s127 = sphi 0, %s113
    %s131 = sphi 0, %s131
    %s133 = sphi 0, %s131
    %s134 = sphi 0, %s133
    %s148 = sphi 0, %s134
    %s152 = sphi 0, %s152
    %s154 = sphi 0, %s152
    %s155 = sphi 0, %s154
    %s169 = sphi 0, %s155
    %s175 = sphi 0, %s177
    %s178 = sphi 0, %s175
    %s179 = sphi 0, %s178
    %s195 = sphi 0, %s179
  $region4: #{early_downsample_forward.1} parent=0 // loop_header_branch
    %16 = sbr.rel (%p14) target = $region8
  $region5: #{early_downsample_forward.1} parent=0 // loop_body
    %s18 = ssub.s32 %s13, 1
    %s19 = ssub.s32 %s13, 2
    %s20 = sadd.s32 %s13, 1
    %s21 = ssub.s32 %s13, %s20
    %p22 = scmp.eq.s32.totalorder %s21, 0
    %s24 = sadd.s32 %s23, 1
    %s25 = scalar_select %p22, %s23, %s24
    %p28 = pneg %p22
    %p29 = scmp.eq.s32.totalorder %s13, 1
    %p30 = por %p28, %p29
    %p31 = scmp.ne.s32.totalorder %s23, %s26
    %p32 = scmp.eq.s32.totalorder %s13, 0
    %p33 = por %p31, %p32
    %p34 = scmp.ne.s32.totalorder %s23, %s26
    %p35 = scmp.eq.s32.totalorder %s18, 1
    %p36 = por %p34, %p35
    %p37 = scmp.ne.s32.totalorder %s26, %s27
    %p38 = scmp.eq.s32.totalorder %s18, 0
    %p39 = por %p37, %p38
    %p40 = scmp.ne.s32.totalorder %s26, %s27
    %p41 = scmp.eq.s32.totalorder %s19, 1
    %p42 = por %p40, %p41
    %p44 = scmp.ne.s32.totalorder %s27, %s43
    %p45 = scmp.eq.s32.totalorder %s19, 0
    %p46 = por %p44, %p45
    %s48 = sadd.s32 %s47, 1
    %p51 = scmp.eq.s32.totalorder %s13, 1
    %p52 = scmp.ne.s32.totalorder %s47, %s49
    %p53 = scmp.eq.s32.totalorder %s13, 0
    %p54 = por %p52, %p53
    %p55 = scmp.ne.s32.totalorder %s47, %s49
    %p56 = scmp.eq.s32.totalorder %s18, 1
    %p57 = por %p55, %p56
    %p58 = scmp.ne.s32.totalorder %s49, %s50
    %p59 = scmp.eq.s32.totalorder %s18, 0
    %p60 = por %p58, %p59
    %p61 = scmp.ne.s32.totalorder %s49, %s50
    %p62 = scmp.eq.s32.totalorder %s19, 1
    %p63 = por %p61, %p62
    %p65 = scmp.ne.s32.totalorder %s50, %s64
    %p66 = scmp.eq.s32.totalorder %s19, 0
    %p67 = por %p65, %p66
    %s69 = sadd.s32 %s68, 1
    %p72 = scmp.eq.s32.totalorder %s13, 1
    %p73 = scmp.ne.s32.totalorder %s68, %s70
    %p74 = scmp.eq.s32.totalorder %s13, 0
    %p75 = por %p73, %p74
    %p76 = scmp.ne.s32.totalorder %s68, %s70
    %p77 = scmp.eq.s32.totalorder %s18, 1
    %p78 = por %p76, %p77
    %p79 = scmp.ne.s32.totalorder %s70, %s71
    %p80 = scmp.eq.s32.totalorder %s18, 0
    %p81 = por %p79, %p80
    %p82 = scmp.ne.s32.totalorder %s70, %s71
    %p83 = scmp.eq.s32.totalorder %s19, 1
    %p84 = por %p82, %p83
    %p86 = scmp.ne.s32.totalorder %s71, %s85
    %p87 = scmp.eq.s32.totalorder %s19, 0
    %p88 = por %p86, %p87
    %s90 = sadd.s32 %s89, 1
    %p93 = scmp.eq.s32.totalorder %s13, 1
    %p94 = scmp.ne.s32.totalorder %s89, %s91
    %p95 = scmp.eq.s32.totalorder %s13, 0
    %p96 = por %p94, %p95
    %p97 = scmp.ne.s32.totalorder %s89, %s91
    %p98 = scmp.eq.s32.totalorder %s18, 1
    %p99 = por %p97, %p98
    %p100 = scmp.ne.s32.totalorder %s91, %s92
    %p101 = scmp.eq.s32.totalorder %s18, 0
    %p102 = por %p100, %p101
    %p103 = scmp.ne.s32.totalorder %s91, %s92
    %p104 = scmp.eq.s32.totalorder %s19, 1
    %p105 = por %p103, %p104
    %p107 = scmp.ne.s32.totalorder %s92, %s106
    %p108 = scmp.eq.s32.totalorder %s19, 0
    %p109 = por %p107, %p108
    %s111 = sadd.s32 %s110, 1
    %p114 = scmp.eq.s32.totalorder %s13, 1
    %p115 = scmp.ne.s32.totalorder %s110, %s112
    %p116 = scmp.eq.s32.totalorder %s13, 0
    %p117 = por %p115, %p116
    %p118 = scmp.ne.s32.totalorder %s110, %s112
    %p119 = scmp.eq.s32.totalorder %s18, 1
    %p120 = por %p118, %p119
    %p121 = scmp.ne.s32.totalorder %s112, %s113
    %p122 = scmp.eq.s32.totalorder %s18, 0
    %p123 = por %p121, %p122
    %p124 = scmp.ne.s32.totalorder %s112, %s113
    %p125 = scmp.eq.s32.totalorder %s19, 1
    %p126 = por %p124, %p125
    %p128 = scmp.ne.s32.totalorder %s113, %s127
    %p129 = scmp.eq.s32.totalorder %s19, 0
    %p130 = por %p128, %p129
    %s132 = sadd.s32 %s131, 1
    %p135 = scmp.eq.s32.totalorder %s13, 1
    %p136 = scmp.ne.s32.totalorder %s131, %s133
    %p137 = scmp.eq.s32.totalorder %s13, 0
    %p138 = por %p136, %p137
    %p139 = scmp.ne.s32.totalorder %s131, %s133
    %p140 = scmp.eq.s32.totalorder %s18, 1
    %p141 = por %p139, %p140
    %p142 = scmp.ne.s32.totalorder %s133, %s134
    %p143 = scmp.eq.s32.totalorder %s18, 0
    %p144 = por %p142, %p143
    %p145 = scmp.ne.s32.totalorder %s133, %s134
    %p146 = scmp.eq.s32.totalorder %s19, 1
    %p147 = por %p145, %p146
    %p149 = scmp.ne.s32.totalorder %s134, %s148
    %p150 = scmp.eq.s32.totalorder %s19, 0
    %p151 = por %p149, %p150
    %s153 = sadd.s32 %s152, 1
    %p156 = scmp.eq.s32.totalorder %s13, 1
    %p157 = scmp.ne.s32.totalorder %s152, %s154
    %p158 = scmp.eq.s32.totalorder %s13, 0
    %p159 = por %p157, %p158
    %p160 = scmp.ne.s32.totalorder %s152, %s154
    %p161 = scmp.eq.s32.totalorder %s18, 1
    %p162 = por %p160, %p161
    %p163 = scmp.ne.s32.totalorder %s154, %s155
    %p164 = scmp.eq.s32.totalorder %s18, 0
    %p165 = por %p163, %p164
    %p166 = scmp.ne.s32.totalorder %s154, %s155
    %p167 = scmp.eq.s32.totalorder %s19, 1
    %p168 = por %p166, %p167
    %p170 = scmp.ne.s32.totalorder %s155, %s169
    %p171 = scmp.eq.s32.totalorder %s19, 0
    %p172 = por %p170, %p171
    %s173 = ssub.s32 %s13, %s20
    %p174 = scmp.eq.s32.totalorder %s173, 0
    %s176 = sadd.s32 %s175, 1
    %s177 = scalar_select %p174, %s175, %s176
    %p180 = pneg %p174
    %p181 = scmp.eq.s32.totalorder %s13, 1
    %p182 = por %p180, %p181
    %p183 = scmp.ne.s32.totalorder %s175, %s178
    %p184 = scmp.eq.s32.totalorder %s13, 0
    %p185 = por %p183, %p184
    %p186 = scmp.ne.s32.totalorder %s175, %s178
    %p187 = scmp.eq.s32.totalorder %s18, 1
    %p188 = por %p186, %p187
    %p189 = scmp.ne.s32.totalorder %s178, %s179
    %p190 = scmp.eq.s32.totalorder %s18, 0
    %p191 = por %p189, %p190
    %p192 = scmp.ne.s32.totalorder %s178, %s179
    %p193 = scmp.eq.s32.totalorder %s19, 1
    %p194 = por %p192, %p193
    %p196 = scmp.ne.s32.totalorder %s179, %s195
    %p197 = scmp.eq.s32.totalorder %s19, 0
    %p198 = por %p196, %p197
    %p199 = scmp.le.s32.totalorder 1, %s13
    %p200 = scmp.lt.s32.totalorder %s13, 3
    %p201 = pnand %p199, %p200
    %p202 = pneg %p201
    // Predicated region
    $region9: #{early_downsample_forward.1} parent=5 // pred_check
      _
    $region10: #{early_downsample_forward.1} parent=5 // pred_check_branch
      %204 = sbr.rel (%p201) target = $region12
    $region11: #{early_downsample_forward.1} parent=5 // pred_region
      %s205 = ssub.s32 %s13, 1
      // Predicated region
      $region13: #{early_downsample_forward.1} parent=11 // pred_check
        %p206 = pneg %p60
      $region14: #{early_downsample_forward.1} parent=11 // pred_check_branch
        %208 = sbr.rel (%p206) target = $region16
      $region15: #{early_downsample_forward.1} parent=11 // pred_region
        _
      $region16: #{early_downsample_forward.1} parent=11 // pred_fallthru
        _
      // Predicated region
      $region17: #{early_downsample_forward.1} parent=11 // pred_check
        %p209 = pneg %p81
      $region18: #{early_downsample_forward.1} parent=11 // pred_check_branch
        %211 = sbr.rel (%p209) target = $region20
      $region19: #{early_downsample_forward.1} parent=11 // pred_region
        _
      $region20: #{early_downsample_forward.1} parent=11 // pred_fallthru
        _
      // Predicated region
      $region21: #{early_downsample_forward.1} parent=11 // pred_check
        %p212 = pneg %p102
      $region22: #{early_downsample_forward.1} parent=11 // pred_check_branch
        %214 = sbr.rel (%p212) target = $region24
      $region23: #{early_downsample_forward.1} parent=11 // pred_region
        _
      $region24: #{early_downsample_forward.1} parent=11 // pred_fallthru
        _
      // Predicated region
      $region25: #{early_downsample_forward.1} parent=11 // pred_check
        %p215 = pneg %p123
      $region26: #{early_downsample_forward.1} parent=11 // pred_check_branch
        %217 = sbr.rel (%p215) target = $region28
      $region27: #{early_downsample_forward.1} parent=11 // pred_region
        _
      $region28: #{early_downsample_forward.1} parent=11 // pred_fallthru
        _
      // Predicated region
      $region29: #{early_downsample_forward.1} parent=11 // pred_check
        %p218 = pneg %p144
      $region30: #{early_downsample_forward.1} parent=11 // pred_check_branch
        %220 = sbr.rel (%p218) target = $region32
      $region31: #{early_downsample_forward.1} parent=11 // pred_region
        _
      $region32: #{early_downsample_forward.1} parent=11 // pred_fallthru
        _
      // Predicated region
      $region33: #{early_downsample_forward.1} parent=11 // pred_check
        %p221 = pneg %p165
      $region34: #{early_downsample_forward.1} parent=11 // pred_check_branch
        %223 = sbr.rel (%p221) target = $region36
      $region35: #{early_downsample_forward.1} parent=11 // pred_region
        _
      $region36: #{early_downsample_forward.1} parent=11 // pred_fallthru
        _
    $region12: #{early_downsample_forward.1} parent=5 // pred_fallthru
      _
    %p224 = scmp.lt.s32.totalorder %s13, 2
    // Predicated region
    $region37: #{early_downsample_forward.1} parent=5 // pred_check
      %p225 = pneg %p224
    $region38: #{early_downsample_forward.1} parent=5 // pred_check_branch
      %227 = sbr.rel (%p225) target = $region40
    $region39: #{early_downsample_forward.1} parent=5 // pred_region
      // Predicated region
      $region41: #{early_downsample_forward.1} parent=39 // pred_check
        %p228 = pneg %p33
      $region42: #{early_downsample_forward.1} parent=39 // pred_check_branch
        %230 = sbr.rel (%p228) target = $region44
      $region43: #{early_downsample_forward.1} parent=39 // pred_region
        %p231 = scmp.lt.s32.totalorder %s13, 1
        %s232 = scalar_select %p231, %s13, 1
        %s233 = smul.addr %s232, 4
        %s234 = smul.addr %s233, 2
        %s235 = scalar_lea.vmem %s0, %s234
      $region44: #{early_downsample_forward.1} parent=39 // pred_fallthru
        _
    $region40: #{early_downsample_forward.1} parent=5 // pred_fallthru
      _
    %p236 = scmp.le.s32.totalorder 1, %s13
    %p237 = scmp.lt.s32.totalorder %s13, 3
    %p238 = pnand %p236, %p237
    %p239 = pneg %p238
    // Predicated region
    $region45: #{early_downsample_forward.1} parent=5 // pred_check
      _
    $region46: #{early_downsample_forward.1} parent=5 // pred_check_branch
      %241 = sbr.rel (%p238) target = $region48
    $region47: #{early_downsample_forward.1} parent=5 // pred_region
      %s242 = ssub.s32 %s13, 1
      %p243 = scmp.lt.s32.totalorder %s18, 1
      %s244 = scalar_select %p243, %s18, 1
      %s245 = smul.addr %s244, 4
      %s246 = smul.addr %s245, 2
      %s247 = scalar_lea.vmem %s0, %s246
      %p248 = pneg %p39
      %p249 = pneg %p36
      %p250 = pneg %p60
      %p251 = pneg %p57
      %p252 = pneg %p81
      %p253 = pneg %p78
      %p254 = pneg %p102
      %p255 = pneg %p99
      %p256 = pneg %p123
      %p257 = pneg %p120
      %p258 = pneg %p144
      %p259 = pneg %p141
      %p260 = pneg %p165
      %p261 = pneg %p162
      %p262 = pneg %p191
      %p263 = pneg %p188
      %p264 = scmp.lt.s32.totalorder %s18, 1
      %s265 = scalar_select %p264, %s18, 1
      %s266 = smul.addr %s265, 8
      %s267 = scalar_lea.vmem %s7, %s266
      %p268 = scmp.lt.s32.totalorder %s18, 1
      %s269 = scalar_select %p268, %s18, 1
      %s270 = smul.addr %s269, 4
      %s271 = smul.addr %s270, 2
      %s272 = scalar_lea.vmem %s0, %s271
      %p273 = scmp.lt.s32.totalorder %s18, 1
      %s274 = scalar_select %p273, %s18, 1
      %s275 = smul.addr %s274, 8
      %s276 = scalar_lea.vmem %s7, %s275
      %vm278 = vcmask 730112
      %279 = vst.msk [vmem:[#allocation2] sm:$0x3] %vm278, 0
      %280 = vst.msk [vmem:[#allocation2 + $0x2] sm:$0x3] %vm278, 0
      %281 = vst.msk [vmem:[#allocation2 + $0x4] sm:$0x3] %vm278, 0
      %282 = vst.msk [vmem:[#allocation2 + $0x6] sm:$0x3] %vm278, 0
      %v283 = vld [vmem:[%s1] sm:$0x3]
      %v284 = vld [vmem:[%s4] sm:$0xf]
      %v285 = vld [vmem:[%s6] sm:$0x1]
      %v286 = vld [vmem:[%s272] sm:$0x3]
      %s287 = scalar_lea.vmem %s272, 2
      %v288 = vld [vmem:[%s287] sm:$0x3]
      %s289 = scalar_lea.vmem %s272, 4
      %v290 = vld [vmem:[%s289] sm:$0x3]
      %s291 = scalar_lea.vmem %s272, 6
      %v292 = vld [vmem:[%s291] sm:$0x3]
      %v294 = vcombine.low %v288, %v288
      %v296 = vunpack.c.l.s4 1983009808
      %v297 = vunpack.c.0.s8 %v296
      %v298 = vlaneseq
      %v299 = vshrl.u32 %v298, 7
      %v300 = vsub.s32 %v297, %v299
      %v301 = vrot.slane %v294, %v300
      %v304 = vunpack.c.l.s4 1983009808
      %v305 = vunpack.c.0.s8 %v304
      %v306 = vlaneseq
      %v307 = vshrl.u32 %v306, 7
      %v308 = vsub.s32 %v305, %v307
      %v309 = vrot.slane %v286, %v308
      %v310 = vcombine.low %v309, %v309
      %311 = vrot.lane.b32.xlu0 %v310, 127
      %v312 = vpop.permute.xlu0 %311
      %v314 = vcombine.low %v290, %v290
      %v316 = vunpack.c.l.s4 1983009808
      %v317 = vunpack.c.0.s8 %v316
      %v318 = vlaneseq
      %v319 = vshrl.u32 %v318, 7
      %v320 = vsub.s32 %v317, %v319
      %v321 = vrot.slane %v314, %v320
      %v322 = vcombine.low %v321, %v321
      %323 = vrot.lane.b32.xlu0 %v321, 127
      %v324 = vpop.permute.xlu0 %323
      %325 = vrot.lane.b32.xlu0 %v310, 119
      %v326 = vpop.permute.xlu0 %325
      %v327 = vcombine.low %v301, %v301
      %328 = vrot.lane.b32.xlu0 %v327, 119
      %v329 = vpop.permute.xlu0 %328
      %330 = vrot.lane.b32.xlu0 %v309, 118
      %v331 = vpop.permute.xlu0 %330
      %vm332 = vcmask 1041408
      %v335 = vsel %vm332, %v286, %v301
      %vm336 = vcmask 1043456
      %v338 = vsel %vm336, %v335, %v312
      %vm339 = vcmask 1045504
      %v341 = vsel %vm339, %v338, %v322
      %v345 = vsel %vm332, %v292, %v324
      %v347 = vsel %vm336, %v345, %v326
      %v349 = vsel %vm339, %v347, %v329
      %352 = vset.pattern.permute.xlu0 0
      %353 = vperm.xlu0 %352, %v284
      %v354 = vpop.permute.xlu0 %353
      %vm356 = vcmask 293888
      %v358 = vsel %vm356, %v283, 0
      %v361 = vsel %vm332, %v331, 0
      %363 = vmatprep.subr.bf16.mxu0 0
      %364 = vmatpush1.bf16.msra.mxu0 %v341
      %365 = vmatprep.subr.bf16.mxu0 0
      %366 = vmatpush1.bf16.msra.mxu0 %v349
      %367 = vmatprep.subr.bf16.mxu0 0
      %368 = vmatpush1.bf16.msra.mxu0 %v361
      %369 = vmatprep.subr.bf16.mxu0 0
      %370 = vmatpush1.bf16.msra.mxu0 0
      %371 = vmatprep.subr.bf16.mxu0 0
      %372 = vmatpush1.bf16.msra.mxu0 0
      %373 = vmatprep.subr.bf16.mxu0 0
      %374 = vmatpush1.bf16.msra.mxu0 0
      %375 = vmatprep.subr.bf16.mxu0 0
      %376 = vmatpush1.bf16.msra.mxu0 0
      %377 = vmatprep.subr.bf16.mxu0 0
      %378 = vmatpush1.bf16.msra.mxu0 0
      %379 = vmatprep.subr.bf16.mxu0 0
      %380 = vmatpush1.bf16.msra.mxu0 0
      %381 = vmatprep.subr.bf16.mxu0 0
      %382 = vmatpush1.bf16.msra.mxu0 0
      %383 = vmatprep.subr.bf16.mxu0 0
      %384 = vmatpush1.bf16.msra.mxu0 0
      %385 = vmatprep.subr.bf16.mxu0 0
      %386 = vmatpush1.bf16.msra.mxu0 0
      %387 = vmatprep.subr.bf16.mxu0 0
      %388 = vmatpush1.bf16.msra.mxu0 0
      %389 = vmatprep.subr.bf16.mxu0 0
      %390 = vmatpush1.bf16.msra.mxu0 0
      %391 = vmatprep.subr.bf16.mxu0 0
      %392 = vmatpush1.bf16.msra.mxu0 0
      %393 = vmatprep.subr.bf16.mxu0 0
      %394 = vmatpush1.bf16.msra.mxu0 0
      %395 = vmatprep.mubr.bf16.mxu0 0
      %396 = vmatmul.mubr.bf16.gmra.mrb[0].mxu0 %v358
      %v397 = vpop.f32.mrb[0].mxu0
      %v398 = vadd.f32 %v354, %v397
      %v399 = vpop.f32.mrb[0].mxu0
      %v400 = vpop.f32.mrb[0].mxu0
      %v401 = vpop.f32.mrb[0].mxu0
      %402 = vdwg.mxu0
      %v403 = vmax.f32 %v398, 0.0
      %v405 = vlaneseq
      %v406 = vshrl.u32 %v405, 7
      %v407 = vsub.s32 0, %v406
      %v408 = vrot.slane %v285, %v407
      %v410 = vmul.f32 %v403, %v408
      %v411 = vpack.c.bf16 %v410, %v410
      %s412 = scalar_lea.vmem [#allocation2], 6
      %vm413 = vcmask 582656
      %414 = vst.msk [vmem:[%s412] sm:$0x3] %vm413, %v411
      %v415 = vld [vmem:[%s287] sm:$0x3]
      %v416 = vld [vmem:[%s272] sm:$0x3]
      %v417 = vld [vmem:[%s291] sm:$0x3]
      %v418 = vld [vmem:[%s289] sm:$0x3]
      %v420 = vcombine.low %v416, %v416
      %v422 = vunpack.c.l.s4 1983009808
      %v423 = vunpack.c.0.s8 %v422
      %v424 = vlaneseq
      %v425 = vshrl.u32 %v424, 7
      %v426 = vsub.s32 %v423, %v425
      %v427 = vrot.slane %v420, %v426
      %428 = vrot.lane.b32.xlu0 %v427, 127
      %v429 = vpop.permute.xlu0 %428
      %v432 = vunpack.c.l.s4 1983009808
      %v433 = vunpack.c.0.s8 %v432
      %v434 = vlaneseq
      %v435 = vshrl.u32 %v434, 7
      %v436 = vsub.s32 %v433, %v435
      %v437 = vrot.slane %v415, %v436
      %v438 = vcombine.low %v437, %v437
      %439 = vrot.lane.b32.xlu0 %v438, 127
      %v440 = vpop.permute.xlu0 %439
      %v442 = vcombine.low %v417, %v417
      %v444 = vunpack.c.l.s4 1983009808
      %v445 = vunpack.c.0.s8 %v444
      %v446 = vlaneseq
      %v447 = vshrl.u32 %v446, 7
      %v448 = vsub.s32 %v445, %v447
      %v449 = vrot.slane %v442, %v448
      %v450 = vcombine.low %v449, %v449
      %v453 = vunpack.c.l.s4 1983009808
      %v454 = vunpack.c.0.s8 %v453
      %v455 = vlaneseq
      %v456 = vshrl.u32 %v455, 7
      %v457 = vsub.s32 %v454, %v456
      %v458 = vrot.slane %v418, %v457
      %459 = vrot.lane.b32.xlu0 %v458, 127
      %v460 = vpop.permute.xlu0 %459
      %461 = vrot.lane.b32.xlu0 %v449, 127
      %v462 = vpop.permute.xlu0 %461
      %463 = vrot.lane.b32.xlu0 %v438, 119
      %v464 = vpop.permute.xlu0 %463
      %v465 = vcombine.low %v427, %v427
      %466 = vrot.lane.b32.xlu0 %v465, 118
      %v467 = vpop.permute.xlu0 %466
      %468 = vrot.lane.b32.xlu0 %v437, 118
      %v469 = vpop.permute.xlu0 %468
      %v472 = vsel %vm332, %v415, %v429
      %v474 = vsel %vm336, %v472, %v440
      %v476 = vsel %vm339, %v474, %v450
      %v480 = vsel %vm332, %v460, %v462
      %v482 = vsel %vm336, %v480, %v464
      %v484 = vsel %vm339, %v482, %v467
      %v487 = vsel %vm332, %v469, 0
      %489 = vmatprep.subr.bf16.mxu0 0
      %490 = vmatpush1.bf16.msra.mxu0 %v476
      %491 = vmatprep.subr.bf16.mxu0 0
      %492 = vmatpush1.bf16.msra.mxu0 %v484
      %493 = vmatprep.subr.bf16.mxu0 0
      %494 = vmatpush1.bf16.msra.mxu0 %v487
      %495 = vmatprep.subr.bf16.mxu0 0
      %496 = vmatpush1.bf16.msra.mxu0 0
      %497 = vmatprep.subr.bf16.mxu0 0
      %498 = vmatpush1.bf16.msra.mxu0 0
      %499 = vmatprep.subr.bf16.mxu0 0
      %500 = vmatpush1.bf16.msra.mxu0 0
      %501 = vmatprep.subr.bf16.mxu0 0
      %502 = vmatpush1.bf16.msra.mxu0 0
      %503 = vmatprep.subr.bf16.mxu0 0
      %504 = vmatpush1.bf16.msra.mxu0 0
      %505 = vmatprep.subr.bf16.mxu0 0
      %506 = vmatpush1.bf16.msra.mxu0 0
      %507 = vmatprep.subr.bf16.mxu0 0
      %508 = vmatpush1.bf16.msra.mxu0 0
      %509 = vmatprep.subr.bf16.mxu0 0
      %510 = vmatpush1.bf16.msra.mxu0 0
      %511 = vmatprep.subr.bf16.mxu0 0
      %512 = vmatpush1.bf16.msra.mxu0 0
      %513 = vmatprep.subr.bf16.mxu0 0
      %514 = vmatpush1.bf16.msra.mxu0 0
      %515 = vmatprep.subr.bf16.mxu0 0
      %516 = vmatpush1.bf16.msra.mxu0 0
      %517 = vmatprep.subr.bf16.mxu0 0
      %518 = vmatpush1.bf16.msra.mxu0 0
      %519 = vmatprep.subr.bf16.mxu0 0
      %520 = vmatpush1.bf16.msra.mxu0 0
      %521 = vmatprep.mubr.bf16.mxu0 0
      %522 = vmatmul.mubr.bf16.gmra.mrb[0].mxu0 %v358
      %v523 = vpop.f32.mrb[0].mxu0
      %v524 = vadd.f32 %v354, %v523
      %v525 = vpop.f32.mrb[0].mxu0
      %v526 = vpop.f32.mrb[0].mxu0
      %v527 = vpop.f32.mrb[0].mxu0
      %528 = vdwg.mxu0
      %v529 = vmax.f32 %v524, 0.0
      %v530 = vmul.f32 %v529, %v408
      %v531 = vpack.c.bf16 %v530, %v530
      %v534 = vunpack.c.l.s4 1983009808
      %v535 = vunpack.c.0.s8 %v534
      %v536 = vlaneseq
      %v537 = vshrl.u32 %v536, 7
      %v538 = vsub.s32 %v535, %v537
      %v539 = vrot.slane %v531, %v538
      %540 = vrot.lane.b32.xlu0 %v539, 1
      %v541 = vpop.permute.xlu0 %540
      %s543 = scalar_lea.vmem [#allocation2], 4
      %vm544 = vcmask 590856
      %545 = vst.msk [vmem:[%s543] sm:$0x3] %vm544, %v541
      %v546 = vld [vmem:[%s289] sm:$0x3]
      %v547 = vld [vmem:[%s291] sm:$0x3]
      %v548 = vld [vmem:[%s272] sm:$0x3]
      %v549 = vld [vmem:[%s287] sm:$0x3]
      %v551 = vcombine.low %v547, %v547
      %v553 = vunpack.c.l.s4 1983009808
      %v554 = vunpack.c.0.s8 %v553
      %v555 = vlaneseq
      %v556 = vshrl.u32 %v555, 7
      %v557 = vsub.s32 %v554, %v556
      %v558 = vrot.slane %v551, %v557
      %v561 = vunpack.c.l.s4 1983009808
      %v562 = vunpack.c.0.s8 %v561
      %v563 = vlaneseq
      %v564 = vshrl.u32 %v563, 7
      %v565 = vsub.s32 %v562, %v564
      %v566 = vrot.slane %v546, %v565
      %v567 = vcombine.low %v566, %v566
      %568 = vrot.lane.b32.xlu0 %v567, 127
      %v569 = vpop.permute.xlu0 %568
      %v571 = vcombine.low %v548, %v548
      %v573 = vunpack.c.l.s4 1983009808
      %v574 = vunpack.c.0.s8 %v573
      %v575 = vlaneseq
      %v576 = vshrl.u32 %v575, 7
      %v577 = vsub.s32 %v574, %v576
      %v578 = vrot.slane %v571, %v577
      %v579 = vcombine.low %v578, %v578
      %580 = vrot.lane.b32.xlu0 %v579, 119
      %v581 = vpop.permute.xlu0 %580
      %v584 = vunpack.c.l.s4 1983009808
      %v585 = vunpack.c.0.s8 %v584
      %v586 = vlaneseq
      %v587 = vshrl.u32 %v586, 7
      %v588 = vsub.s32 %v585, %v587
      %v589 = vrot.slane %v549, %v588
      %590 = vrot.lane.b32.xlu0 %v589, 119
      %v591 = vpop.permute.xlu0 %590
      %592 = vrot.lane.b32.xlu0 %v578, 118
      %v593 = vpop.permute.xlu0 %592
      %594 = vrot.lane.b32.xlu0 %v567, 119
      %v595 = vpop.permute.xlu0 %594
      %v596 = vcombine.low %v558, %v558
      %597 = vrot.lane.b32.xlu0 %v596, 119
      %v598 = vpop.permute.xlu0 %597
      %599 = vrot.lane.b32.xlu0 %v566, 118
      %v600 = vpop.permute.xlu0 %599
      %v603 = vsel %vm332, %v546, %v558
      %v605 = vsel %vm336, %v603, %v569
      %v607 = vsel %vm339, %v605, %v581
      %v611 = vsel %vm332, %v591, %v593
      %v613 = vsel %vm336, %v611, %v595
      %v615 = vsel %vm339, %v613, %v598
      %v618 = vsel %vm332, %v600, 0
      %620 = vmatprep.subr.bf16.mxu0 0
      %621 = vmatpush1.bf16.msra.mxu0 %v607
      %622 = vmatprep.subr.bf16.mxu0 0
      %623 = vmatpush1.bf16.msra.mxu0 %v615
      %624 = vmatprep.subr.bf16.mxu0 0
      %625 = vmatpush1.bf16.msra.mxu0 %v618
      %626 = vmatprep.subr.bf16.mxu0 0
      %627 = vmatpush1.bf16.msra.mxu0 0
      %628 = vmatprep.subr.bf16.mxu0 0
      %629 = vmatpush1.bf16.msra.mxu0 0
      %630 = vmatprep.subr.bf16.mxu0 0
      %631 = vmatpush1.bf16.msra.mxu0 0
      %632 = vmatprep.subr.bf16.mxu0 0
      %633 = vmatpush1.bf16.msra.mxu0 0
      %634 = vmatprep.subr.bf16.mxu0 0
      %635 = vmatpush1.bf16.msra.mxu0 0
      %636 = vmatprep.subr.bf16.mxu0 0
      %637 = vmatpush1.bf16.msra.mxu0 0
      %638 = vmatprep.subr.bf16.mxu0 0
      %639 = vmatpush1.bf16.msra.mxu0 0
      %640 = vmatprep.subr.bf16.mxu0 0
      %641 = vmatpush1.bf16.msra.mxu0 0
      %642 = vmatprep.subr.bf16.mxu0 0
      %643 = vmatpush1.bf16.msra.mxu0 0
      %644 = vmatprep.subr.bf16.mxu0 0
      %645 = vmatpush1.bf16.msra.mxu0 0
      %646 = vmatprep.subr.bf16.mxu0 0
      %647 = vmatpush1.bf16.msra.mxu0 0
      %648 = vmatprep.subr.bf16.mxu0 0
      %649 = vmatpush1.bf16.msra.mxu0 0
      %650 = vmatprep.subr.bf16.mxu0 0
      %651 = vmatpush1.bf16.msra.mxu0 0
      %652 = vmatprep.mubr.bf16.mxu0 0
      %653 = vmatmul.mubr.bf16.gmra.mrb[0].mxu0 %v358
      %v654 = vpop.f32.mrb[0].mxu0
      %v655 = vadd.f32 %v354, %v654
      %v656 = vpop.f32.mrb[0].mxu0
      %v657 = vpop.f32.mrb[0].mxu0
      %v658 = vpop.f32.mrb[0].mxu0
      %659 = vdwg.mxu0
      %v660 = vmax.f32 %v655, 0.0
      %v661 = vmul.f32 %v660, %v408
      %v662 = vpack.c.bf16 %v661, %v661
      %v665 = vunpack.c.l.s4 1983009808
      %v666 = vunpack.c.0.s8 %v665
      %v667 = vlaneseq
      %v668 = vshrl.u32 %v667, 7
      %v669 = vsub.s32 %v666, %v668
      %v670 = vrot.slane %v662, %v669
      %671 = vrot.lane.b32.xlu0 %v670, 9
      %v672 = vpop.permute.xlu0 %671
      %s674 = scalar_lea.vmem [#allocation2], 2
      %vm675 = vcmask 656456
      %676 = vst.msk [vmem:[%s674] sm:$0x3] %vm675, %v672
      %v677 = vld [vmem:[%s291] sm:$0x3]
      %v678 = vld [vmem:[%s289] sm:$0x3]
      %v679 = vld [vmem:[%s287] sm:$0x3]
      %v680 = vld [vmem:[%s272] sm:$0x3]
      %v682 = vcombine.low %v678, %v678
      %v684 = vunpack.c.l.s4 1983009808
      %v685 = vunpack.c.0.s8 %v684
      %v686 = vlaneseq
      %v687 = vshrl.u32 %v686, 7
      %v688 = vsub.s32 %v685, %v687
      %v689 = vrot.slane %v682, %v688
      %690 = vrot.lane.b32.xlu0 %v689, 127
      %v691 = vpop.permute.xlu0 %690
      %v694 = vunpack.c.l.s4 1983009808
      %v695 = vunpack.c.0.s8 %v694
      %v696 = vlaneseq
      %v697 = vshrl.u32 %v696, 7
      %v698 = vsub.s32 %v695, %v697
      %v699 = vrot.slane %v677, %v698
      %v700 = vcombine.low %v699, %v699
      %701 = vrot.lane.b32.xlu0 %v700, 127
      %v702 = vpop.permute.xlu0 %701
      %v704 = vcombine.low %v679, %v679
      %v706 = vunpack.c.l.s4 1983009808
      %v707 = vunpack.c.0.s8 %v706
      %v708 = vlaneseq
      %v709 = vshrl.u32 %v708, 7
      %v710 = vsub.s32 %v707, %v709
      %v711 = vrot.slane %v704, %v710
      %v712 = vcombine.low %v711, %v711
      %713 = vrot.lane.b32.xlu0 %v712, 119
      %v714 = vpop.permute.xlu0 %713
      %v717 = vunpack.c.l.s4 1983009808
      %v718 = vunpack.c.0.s8 %v717
      %v719 = vlaneseq
      %v720 = vshrl.u32 %v719, 7
      %v721 = vsub.s32 %v718, %v720
      %v722 = vrot.slane %v680, %v721
      %723 = vrot.lane.b32.xlu0 %v722, 118
      %v724 = vpop.permute.xlu0 %723
      %725 = vrot.lane.b32.xlu0 %v711, 118
      %v726 = vpop.permute.xlu0 %725
      %727 = vrot.lane.b32.xlu0 %v700, 119
      %v728 = vpop.permute.xlu0 %727
      %v729 = vcombine.low %v689, %v689
      %730 = vrot.lane.b32.xlu0 %v729, 118
      %v731 = vpop.permute.xlu0 %730
      %732 = vrot.lane.b32.xlu0 %v699, 118
      %v733 = vpop.permute.xlu0 %732
      %v736 = vsel %vm332, %v677, %v691
      %v738 = vsel %vm336, %v736, %v702
      %v740 = vsel %vm339, %v738, %v714
      %v744 = vsel %vm332, %v724, %v726
      %v746 = vsel %vm336, %v744, %v728
      %v748 = vsel %vm339, %v746, %v731
      %v751 = vsel %vm332, %v733, 0
      %753 = vmatprep.subr.bf16.mxu0 0
      %754 = vmatpush1.bf16.msra.mxu0 %v740
      %755 = vmatprep.subr.bf16.mxu0 0
      %756 = vmatpush1.bf16.msra.mxu0 %v748
      %757 = vmatprep.subr.bf16.mxu0 0
      %758 = vmatpush1.bf16.msra.mxu0 %v751
      %759 = vmatprep.subr.bf16.mxu0 0
      %760 = vmatpush1.bf16.msra.mxu0 0
      %761 = vmatprep.subr.bf16.mxu0 0
      %762 = vmatpush1.bf16.msra.mxu0 0
      %763 = vmatprep.subr.bf16.mxu0 0
      %764 = vmatpush1.bf16.msra.mxu0 0
      %765 = vmatprep.subr.bf16.mxu0 0
      %766 = vmatpush1.bf16.msra.mxu0 0
      %767 = vmatprep.subr.bf16.mxu0 0
      %768 = vmatpush1.bf16.msra.mxu0 0
      %769 = vmatprep.subr.bf16.mxu0 0
      %770 = vmatpush1.bf16.msra.mxu0 0
      %771 = vmatprep.subr.bf16.mxu0 0
      %772 = vmatpush1.bf16.msra.mxu0 0
      %773 = vmatprep.subr.bf16.mxu0 0
      %774 = vmatpush1.bf16.msra.mxu0 0
      %775 = vmatprep.subr.bf16.mxu0 0
      %776 = vmatpush1.bf16.msra.mxu0 0
      %777 = vmatprep.subr.bf16.mxu0 0
      %778 = vmatpush1.bf16.msra.mxu0 0
      %779 = vmatprep.subr.bf16.mxu0 0
      %780 = vmatpush1.bf16.msra.mxu0 0
      %781 = vmatprep.subr.bf16.mxu0 0
      %782 = vmatpush1.bf16.msra.mxu0 0
      %783 = vmatprep.subr.bf16.mxu0 0
      %784 = vmatpush1.bf16.msra.mxu0 0
      %785 = vmatprep.mubr.bf16.mxu0 0
      %786 = vmatmul.mubr.bf16.gmra.mrb[0].mxu0 %v358
      %v787 = vpop.f32.mrb[0].mxu0
      %v788 = vadd.f32 %v354, %v787
      %v789 = vpop.f32.mrb[0].mxu0
      %v790 = vpop.f32.mrb[0].mxu0
      %v791 = vpop.f32.mrb[0].mxu0
      %792 = vdwg.mxu0
      %v793 = vmax.f32 %v788, 0.0
      %v794 = vmul.f32 %v793, %v408
      %v795 = vpack.c.bf16 %v794, %v794
      %v798 = vunpack.c.l.s4 1983009808
      %v799 = vunpack.c.0.s8 %v798
      %v800 = vlaneseq
      %v801 = vshrl.u32 %v800, 7
      %v802 = vsub.s32 %v799, %v801
      %v803 = vrot.slane %v795, %v802
      %804 = vrot.lane.b32.xlu0 %v803, 10
      %v805 = vpop.permute.xlu0 %804
      %vm807 = vcmask 664656
      %808 = vst.msk [vmem:[#allocation2] sm:$0x3] %vm807, %v805
      %v809 = vld [vmem:[#allocation2] sm:$0x3]
      %v810 = vld [vmem:[%s674] sm:$0x3]
      %v811 = vld [vmem:[%s543] sm:$0x3]
      %v812 = vld [vmem:[%s412] sm:$0x3]
      %v814 = vcombine.low %v810, %v810
      %v816 = vunpack.c.l.s4 1983009808
      %v817 = vunpack.c.0.s8 %v816
      %v818 = vlaneseq
      %v819 = vshrl.u32 %v818, 7
      %v820 = vsub.s32 %v817, %v819
      %v821 = vrot.slane %v814, %v820
      %v824 = vunpack.c.l.s4 1983009808
      %v825 = vunpack.c.0.s8 %v824
      %v826 = vlaneseq
      %v827 = vshrl.u32 %v826, 7
      %v828 = vsub.s32 %v825, %v827
      %v829 = vrot.slane %v809, %v828
      %v830 = vcombine.low %v829, %v829
      %831 = vrot.lane.b32.xlu0 %v830, 127
      %v832 = vpop.permute.xlu0 %831
      %v834 = vcombine.low %v811, %v811
      %v836 = vunpack.c.l.s4 1983009808
      %v837 = vunpack.c.0.s8 %v836
      %v838 = vlaneseq
      %v839 = vshrl.u32 %v838, 7
      %v840 = vsub.s32 %v837, %v839
      %v841 = vrot.slane %v834, %v840
      %v842 = vcombine.low %v841, %v841
      %843 = vrot.lane.b32.xlu0 %v841, 127
      %v844 = vpop.permute.xlu0 %843
      %845 = vrot.lane.b32.xlu0 %v830, 119
      %v846 = vpop.permute.xlu0 %845
      %v847 = vcombine.low %v821, %v821
      %848 = vrot.lane.b32.xlu0 %v847, 119
      %v849 = vpop.permute.xlu0 %848
      %850 = vrot.lane.b32.xlu0 %v829, 118
      %v851 = vpop.permute.xlu0 %850
      %v854 = vsel %vm332, %v809, %v821
      %v856 = vsel %vm336, %v854, %v832
      %v858 = vsel %vm339, %v856, %v842
      %v862 = vsel %vm332, %v812, %v844
      %v864 = vsel %vm336, %v862, %v846
      %v866 = vsel %vm339, %v864, %v849
      %v868 = vld [vmem:[%s2] sm:$0xf]
      %v869 = vld [vmem:[%s3] sm:$0xf]
      %v870 = vld [vmem:[%s291] sm:$0x3]
      %vm871 = vcmask 31744
      %v873 = vsel %vm871, %v869, 0
      %v876 = vsel %vm332, %v870, 0
      %878 = vmatprep.subr.bf16.mxu0 0
      %879 = vmatpush1.bf16.msra.mxu0 %v876
      %880 = vmatprep.subr.bf16.mxu0 0
      %881 = vmatpush1.bf16.msra.mxu0 0
      %882 = vmatprep.subr.bf16.mxu0 0
      %883 = vmatpush1.bf16.msra.mxu0 0
      %884 = vmatprep.subr.bf16.mxu0 0
      %885 = vmatpush1.bf16.msra.mxu0 0
      %886 = vmatprep.subr.bf16.mxu0 0
      %887 = vmatpush1.bf16.msra.mxu0 0
      %888 = vmatprep.subr.bf16.mxu0 0
      %889 = vmatpush1.bf16.msra.mxu0 0
      %890 = vmatprep.subr.bf16.mxu0 0
      %891 = vmatpush1.bf16.msra.mxu0 0
      %892 = vmatprep.subr.bf16.mxu0 0
      %893 = vmatpush1.bf16.msra.mxu0 0
      %894 = vmatprep.subr.bf16.mxu0 0
      %895 = vmatpush1.bf16.msra.mxu0 0
      %896 = vmatprep.subr.bf16.mxu0 0
      %897 = vmatpush1.bf16.msra.mxu0 0
      %898 = vmatprep.subr.bf16.mxu0 0
      %899 = vmatpush1.bf16.msra.mxu0 0
      %900 = vmatprep.subr.bf16.mxu0 0
      %901 = vmatpush1.bf16.msra.mxu0 0
      %902 = vmatprep.subr.bf16.mxu0 0
      %903 = vmatpush1.bf16.msra.mxu0 0
      %904 = vmatprep.subr.bf16.mxu0 0
      %905 = vmatpush1.bf16.msra.mxu0 0
      %906 = vmatprep.subr.bf16.mxu0 0
      %907 = vmatpush1.bf16.msra.mxu0 0
      %908 = vmatprep.subr.bf16.mxu0 0
      %909 = vmatpush1.bf16.msra.mxu0 0
      %910 = vmatprep.mubr.bf16.mxu0 0
      %911 = vmatmul.mubr.bf16.gmra.mrb[0].mxu0 %v873
      %v912 = vpop.f32.mrb[0].mxu0
      %v913 = vadd.f32 0.0, %v912
      %v914 = vpop.f32.mrb[0].mxu0
      %v915 = vpop.f32.mrb[0].mxu0
      %v916 = vpop.f32.mrb[0].mxu0
      %917 = vdwg.mxu0
      %v919 = vsel %vm356, %v868, 0
      %v922 = vsel %vm332, %v851, 0
      %924 = vmatprep.subr.bf16.mxu0 0
      %925 = vmatpush1.bf16.msra.mxu0 %v858
      %926 = vmatprep.subr.bf16.mxu0 0
      %927 = vmatpush1.bf16.msra.mxu0 %v866
      %928 = vmatprep.subr.bf16.mxu0 0
      %929 = vmatpush1.bf16.msra.mxu0 %v922
      %930 = vmatprep.subr.bf16.mxu0 0
      %931 = vmatpush1.bf16.msra.mxu0 0
      %932 = vmatprep.subr.bf16.mxu0 0
      %933 = vmatpush1.bf16.msra.mxu0 0
      %934 = vmatprep.subr.bf16.mxu0 0
      %935 = vmatpush1.bf16.msra.mxu0 0
      %936 = vmatprep.subr.bf16.mxu0 0
      %937 = vmatpush1.bf16.msra.mxu0 0
      %938 = vmatprep.subr.bf16.mxu0 0
      %939 = vmatpush1.bf16.msra.mxu0 0
      %940 = vmatprep.subr.bf16.mxu0 0
      %941 = vmatpush1.bf16.msra.mxu0 0
      %942 = vmatprep.subr.bf16.mxu0 0
      %943 = vmatpush1.bf16.msra.mxu0 0
      %944 = vmatprep.subr.bf16.mxu0 0
      %945 = vmatpush1.bf16.msra.mxu0 0
      %946 = vmatprep.subr.bf16.mxu0 0
      %947 = vmatpush1.bf16.msra.mxu0 0
      %948 = vmatprep.subr.bf16.mxu0 0
      %949 = vmatpush1.bf16.msra.mxu0 0
      %950 = vmatprep.subr.bf16.mxu0 0
      %951 = vmatpush1.bf16.msra.mxu0 0
      %952 = vmatprep.subr.bf16.mxu0 0
      %953 = vmatpush1.bf16.msra.mxu0 0
      %954 = vmatprep.subr.bf16.mxu0 0
      %955 = vmatpush1.bf16.msra.mxu0 0
      %956 = vmatprep.mubr.bf16.mxu0 0
      %957 = vmatmul.mubr.bf16.gmra.mrb[0].mxu0 %v919
      %v958 = vpop.f32.mrb[0].mxu0
      %v959 = vadd.f32 %v913, %v958
      %v960 = vpop.f32.mrb[0].mxu0
      %v961 = vpop.f32.mrb[0].mxu0
      %v962 = vpop.f32.mrb[0].mxu0
      %963 = vdwg.mxu0
      %v964 = vld [vmem:[%s5] sm:$0xff]
      %966 = vset.pattern.permute.xlu0 0
      %967 = vperm.xlu0 %966, %v964
      %v968 = vpop.permute.xlu0 %967
      %v970 = vadd.f32 %v959, %v968
      %v971 = vmax.f32 %v970, 0.0
      %vm972 = vcmask 588800
      %973 = vst.msk [vmem:[%s276] sm:$0xff] %vm972, %v971
      %p974 = scmp.lt.s32.totalorder %s18, 1
      %s975 = scalar_select %p974, %s18, 1
      %s976 = smul.addr %s975, 8
      %s977 = scalar_lea.vmem %s7, %s976
      // Predicated region
      $region49: #{early_downsample_forward.1} parent=47 // pred_check
        %p978 = pneg %p188
      $region50: #{early_downsample_forward.1} parent=47 // pred_check_branch
        %980 = sbr.rel (%p978) target = $region52
      $region51: #{early_downsample_forward.1} parent=47 // pred_region
        _
      $region52: #{early_downsample_forward.1} parent=47 // pred_fallthru
        _
    $region48: #{early_downsample_forward.1} parent=5 // pred_fallthru
      _
    %p981 = scmp.le.s32.totalorder 2, %s13
    // Predicated region
    $region53: #{early_downsample_forward.1} parent=5 // pred_check
      %p982 = pneg %p981
    $region54: #{early_downsample_forward.1} parent=5 // pred_check_branch
      %984 = sbr.rel (%p982) target = $region56
    $region55: #{early_downsample_forward.1} parent=5 // pred_region
      %s985 = ssub.s32 %s13, 2
      // Predicated region
      $region57: #{early_downsample_forward.1} parent=55 // pred_check
        %p986 = pneg %p194
      $region58: #{early_downsample_forward.1} parent=55 // pred_check_branch
        %988 = sbr.rel (%p986) target = $region60
      $region59: #{early_downsample_forward.1} parent=55 // pred_region
        %p989 = scmp.lt.s32.totalorder %s19, 1
        %s990 = scalar_select %p989, %s19, 1
        %s991 = smul.addr %s990, 8
        %s992 = scalar_lea.vmem %s7, %s991
      $region60: #{early_downsample_forward.1} parent=55 // pred_fallthru
        _
    $region56: #{early_downsample_forward.1} parent=5 // pred_fallthru
      _
  $region6: #{early_downsample_forward.1} parent=0 // loop_footer
    %s17 = sadd.s32 1, %s13
  $region7: #{early_downsample_forward.1} parent=0 // loop_footer_branch
    %12 = sbr.rel target = $region3
  $region8: #{early_downsample_forward.1} parent=0 // loop_exit
    _

</llo_original>
